<compile_context>
chip_gen: v7x
topology: tpu7x:2x2x1
jax: 0.10.0
libtpu: 0.0.40
codegen_flags: <defaults>
</compile_context>

<pallas_src>
import functools

import jax
import jax.numpy as jnp
from jax import lax
from jax.experimental import pallas as pl
from jax.experimental.pallas import tpu as pltpu


_MAX_TILE_N = 8192   # rows; bounds fully-unrolled vector code / compile time


def _static_pow(base, gamma):
    """base**gamma with static gamma; integer gammas stay on the VPU."""
    g = float(gamma)
    if g == int(g) and int(g) >= 0:
        e = int(g)
        if e == 0:
            return jnp.ones_like(base)
        result = None
        while True:
            if e & 1:
                result = base if result is None else result * base
            e >>= 1
            if not e:
                break
            base = base * base
        return result
    # Non-integer gamma: clamp tiny negative round-off before the EUP pow path.
    return jnp.power(jnp.maximum(base, 0.0), g)


def _focal_rows(x, w_t, tgt, *, alpha, gamma):
    """Per-row focal loss for one (T, C) tile. Returns (T, 1) f32."""
    x = x.astype(jnp.float32)                                      # (T, C)
    m = jnp.max(x, axis=-1, keepdims=True)                         # (T, 1)
    lse = jnp.log(jnp.sum(jnp.exp(x - m), axis=-1, keepdims=True))

    # Gather logit at the target class with a where-select (no one-hot temp).
    class_ids = lax.broadcasted_iota(jnp.int32, x.shape, 1)        # (T, C)
    x_t = jnp.sum(jnp.where(class_ids == tgt, x, 0.0),
                  axis=-1, keepdims=True)                          # (T, 1)

    logp_t = (x_t - m) - lse                                       # (T, 1)
    ce = -w_t * logp_t
    pt = jnp.exp(-ce)
    mod = _static_pow(1.0 - pt, gamma)
    return alpha * mod * ce                                        # (T, 1)


def _unpack_side(side_ref):
    """side block is (T, 2) f32: col 0 = per-row class weight, col 1 = target."""
    side = side_ref[...].astype(jnp.float32)
    w_t = side[:, 0:1]                                             # (T, 1) f32
    tgt = side[:, 1:2].astype(jnp.int32)                           # (T, 1) i32
    return w_t, tgt


def _row_mask(tile_n, n_rows, shape):
    row = pl.program_id(0) * tile_n + lax.broadcasted_iota(jnp.int32, shape, 0)
    return row < n_rows


def _focal_none_kernel(logits_ref, side_ref, out_ref,
                       *, alpha, gamma, n_rows, tile_n):
    w_t, tgt = _unpack_side(side_ref)
    focal = _focal_rows(logits_ref[...], w_t, tgt, alpha=alpha, gamma=gamma)
    masked = jnp.where(_row_mask(tile_n, n_rows, focal.shape), focal, 0.0)
    # Lane-dense store: write one (tile_n,)-wide row per tile instead of a
    # (tile_n, 1) column of 1-lane masked stores.
    out_ref[0, 0, :] = masked[:, 0]


def _focal_psum_kernel(logits_ref, side_ref, out_ref,
                       *, alpha, gamma, n_rows, tile_n):
    w_t, tgt = _unpack_side(side_ref)
    focal = _focal_rows(logits_ref[...], w_t, tgt, alpha=alpha, gamma=gamma)
    masked = jnp.where(_row_mask(tile_n, n_rows, focal.shape), focal, 0.0)
    # Per-tile partial sum; final sum / normalization happens in the wrapper so
    # the grid axis can stay "parallel" (both TensorCores on v7x).
    out_ref[...] = jnp.sum(masked, axis=0, keepdims=True).reshape(1, 1, 1)


def _vmem_budget_and_limit():
    """Generation-aware VMEM budget (tile sizing) and scoped limit."""
    cap = 64 * 1024 * 1024                       # conservative fallback (v7x physical)
    try:
        cap = int(pltpu.get_tpu_info().vmem_capacity_bytes)
    except Exception:
        pass
    cap = max(cap, 32 * 1024 * 1024)
    vmem_limit = min((cap * 3) // 4, 112 * 1024 * 1024)   # 96 MiB v5e/v6e, 48 MiB v7x
    return vmem_limit // 2, vmem_limit


def _pick_tile_n(n, c, itemsize, vmem_budget):
    """Largest 16-row-granular tile whose streamed blocks + in-kernel f32
    temporaries (lane-padded to 128) fit the VMEM budget."""
    lane_c = -(-c // 128) * 128
    bytes_per_row = (
        2 * lane_c * itemsize      # double-buffered logits block (lane-padded in VMEM)
        + 2 * 128 * 4              # double-buffered (T, 2) f32 side block (lane-padded)
        + 4 * lane_c * 4           # ~4 live (T, C) f32 temporaries in the body
        + 2 * 8 * 4                # double-buffered (1, T) output row (sublane-padded)
    )
    tile = vmem_budget // max(1, bytes_per_row)
    tile = max(16, min(_MAX_TILE_N, (tile // 16) * 16))
    n16 = -(-n // 16) * 16
    return min(tile, n16)


def focal_loss(inputs, targets, *, alpha=1.0, gamma=2.0, class_weights=None,
               reduction='mean', tile_n=None):
    """inputs: (N, C) float logits (f32 or bf16); targets: (N,) int class ids."""
    n, c = inputs.shape
    targets = jnp.asarray(targets, dtype=jnp.int32)

    # Class-weight gather hoisted to the wrapper (O(N), trivial XLA); pack both
    # per-row side streams into one (N, 2) f32 array -> one small DMA per tile.
    # (Targets fit exactly in f32 for any realistic class count.)
    if class_weights is None:
        w_t = jnp.ones((n,), dtype=jnp.float32)
    else:
        w_t = jnp.asarray(class_weights, dtype=jnp.float32)[targets]
    side = jnp.stack([w_t, targets.astype(jnp.float32)], axis=1)   # (N, 2)

    budget, vmem_limit = _vmem_budget_and_limit()
    if tile_n is None:
        tile_n = _pick_tile_n(n, c, inputs.dtype.itemsize, budget)
    tile_n = max(16, (int(tile_n) // 16) * 16)      # multiple of 16 (bf16 packing)
    n16 = -(-n // 16) * 16
    tile_n = min(tile_n, n16)
    num_tiles = -(-n // tile_n)

    # NOTE: no wrapper-side padding of the logits. The last grid block may be
    # partial; rows >= n are masked in-kernel before any store/reduction.
    in_specs = [
        pl.BlockSpec((tile_n, c), lambda i: (i, 0)),   # logits (streamed)
        pl.BlockSpec((tile_n, 2), lambda i: (i, 0)),   # [w_t, target] (streamed)
    ]

    common = dict(alpha=float(alpha), gamma=float(gamma), n_rows=n, tile_n=tile_n)
    if reduction in ('mean', 'sum'):
        kernel = functools.partial(_focal_psum_kernel, **common)
        out_shape = jax.ShapeDtypeStruct((num_tiles, 1, 1), jnp.float32)
        out_spec = pl.BlockSpec((1, 1, 1), lambda i: (i, 0, 0))
    else:  # 'none'
        kernel = functools.partial(_focal_none_kernel, **common)
        out_shape = jax.ShapeDtypeStruct((num_tiles, 1, tile_n), jnp.float32)
        out_spec = pl.BlockSpec((1, 1, tile_n), lambda i: (i, 0, 0))

    result = pl.pallas_call(
        kernel,
        out_shape=out_shape,
        grid_spec=pltpu.PrefetchScalarGridSpec(
            num_scalar_prefetch=0,
            grid=(num_tiles,),
            in_specs=in_specs,
            out_specs=out_spec,
        ),
        compiler_params=pltpu.CompilerParams(
            dimension_semantics=("parallel",),
            vmem_limit_bytes=vmem_limit,
        ),
    )(inputs, side)

    if reduction == 'mean':
        # Matches the module: cross_entropy(reduction='none') then .mean() -> /N
        # (NOT the weighted normalization of cross_entropy(reduction='mean')).
        return jnp.sum(result) / jnp.float32(n)
    if reduction == 'sum':
        return jnp.sum(result)
    return result.reshape(-1)[:n]


def _focal_loss_ref(inputs, targets, *, alpha, gamma, class_weights, reduction):
    """Pure-JAX reference mirroring F.cross_entropy(weight=..., reduction='none')."""
    logp = jax.nn.log_softmax(inputs.astype(jnp.float32), axis=-1)
    logp_t = jnp.take_along_axis(logp, targets[:, None], axis=-1)[:, 0]
    if class_weights is None:
        w_t = jnp.ones_like(logp_t)
    else:
        w_t = jnp.asarray(class_weights, dtype=jnp.float32)[targets]
    ce = -w_t * logp_t
    pt = jnp.exp(-ce)
    focal = alpha * (1.0 - pt) ** gamma * ce
    if reduction == 'mean':
        return focal.mean()
    if reduction == 'sum':
        return focal.sum()
    return focal


if __name__ == "__main__":
    key = jax.random.PRNGKey(0)
    k1, k2 = jax.random.split(key)

    # N deliberately not a tile multiple: with tile_n=256 -> 3 tiles, the last
    # one partial (no wrapper pad; garbage rows masked in-kernel).
    N, C = 600, 16
    logits = jax.random.normal(k1, (N, C), dtype=jnp.float32)
    targets = jax.random.randint(k2, (N,), 0, C, dtype=jnp.int32)
    class_weights = 0.5 + 0.1 * jnp.arange(C, dtype=jnp.float32)

    for reduction in ("mean", "sum", "none"):
        out = focal_loss(logits, targets, alpha=1.0, gamma=2.0,
                         class_weights=class_weights, reduction=reduction,
                         tile_n=256)
        out = jax.block_until_ready(out)
        ref = _focal_loss_ref(logits, targets, alpha=1.0, gamma=2.0,
                              class_weights=class_weights, reduction=reduction)
        assert jnp.allclose(out, ref, rtol=1e-5, atol=1e-4), (reduction, out, ref)

    # Auto (VMEM-budgeted) tile size + no class weights.
    out = focal_loss(logits, targets, alpha=0.25, gamma=2.0,
                     class_weights=None, reduction='mean')
    out = jax.block_until_ready(out)
    ref = _focal_loss_ref(logits, targets, alpha=0.25, gamma=2.0,
                          class_weights=None, reduction='mean')
    assert jnp.allclose(out, ref, rtol=1e-5, atol=1e-5), (out, ref)

    # bf16 logits streamed as bf16 (no wrapper pre-cast); kernel upcasts in VMEM.
    logits_bf16 = logits.astype(jnp.bfloat16)
    out = focal_loss(logits_bf16, targets, alpha=1.0, gamma=2.0,
                     class_weights=class_weights, reduction='mean', tile_n=256)
    out = jax.block_until_ready(out)
    ref = _focal_loss_ref(logits_bf16, targets, alpha=1.0, gamma=2.0,
                          class_weights=class_weights, reduction='mean')
    assert jnp.allclose(out, ref, rtol=1e-4, atol=1e-4), (out, ref)

    print("KERNEL_OK")
</pallas_src>

<mosaic_0001>
module attributes {stable_mosaic.version = 11 : i64} {
  func.func @_focal_psum_kernel(%arg0: i32, %arg1: memref<256x16xf32, #tpu.memory_space<vmem>>, %arg2: memref<256x2xf32, #tpu.memory_space<vmem>>, %arg3: memref<1x1x1xf32, #tpu.memory_space<vmem>>) attributes {dimension_semantics = [#tpu.dimension_semantics<parallel>], iteration_bounds = array<i64: 3>, scalar_prefetch = 0 : i64, scratch_operands = 0 : i64, tpu.core_type = #tpu.core_type<tc>, window_params = [{transform_indices = @transform_0, window_bounds = array<i64: 256, 16>}, {transform_indices = @transform_1, window_bounds = array<i64: 256, 2>}, {transform_indices = @transform_2, window_bounds = array<i64: 1, 1, 1>}]} {
    %c0 = arith.constant 0 : index
    %c0_0 = arith.constant 0 : index
    %0 = vector.load %arg2[%c0, %c0_0] : memref<256x2xf32, #tpu.memory_space<vmem>>, vector<256x2xf32>
    %1 = vector.extract_strided_slice %0 {offsets = [0, 0], sizes = [256, 1], strides = [1, 1]} : vector<256x2xf32> to vector<256x1xf32>
    %2 = vector.extract_strided_slice %0 {offsets = [0, 1], sizes = [256, 1], strides = [1, 1]} : vector<256x2xf32> to vector<256x1xf32>
    %3 = arith.fptosi %2 : vector<256x1xf32> to vector<256x1xi32>
    %c0_1 = arith.constant 0 : index
    %c0_2 = arith.constant 0 : index
    %4 = vector.load %arg1[%c0_1, %c0_2] : memref<256x16xf32, #tpu.memory_space<vmem>>, vector<256x16xf32>
    %cst = arith.constant dense<0xFF800000> : vector<256xf32>
    %5 = vector.multi_reduction <maximumf>, %4, %cst [1] : vector<256x16xf32> to vector<256xf32>
    %6 = vector.shape_cast %5 : vector<256xf32> to vector<256x1xf32>
    %7 = vector.broadcast %6 : vector<256x1xf32> to vector<256x16xf32>
    %8 = arith.subf %4, %7 : vector<256x16xf32>
    %9 = math.exp %8 : vector<256x16xf32>
    %cst_3 = arith.constant dense<0.000000e+00> : vector<256xf32>
    %10 = vector.multi_reduction <add>, %9, %cst_3 [1] : vector<256x16xf32> to vector<256xf32>
    %11 = vector.shape_cast %10 : vector<256xf32> to vector<256x1xf32>
    %12 = math.log %11 : vector<256x1xf32>
    %13 = tpu.iota {dimensions = array<i32: 1>} : vector<256x16xi32>
    %14 = vector.broadcast %3 : vector<256x1xi32> to vector<256x16xi32>
    %15 = arith.cmpi eq, %13, %14 : vector<256x16xi32>
    %cst_4 = arith.constant 0.000000e+00 : f32
    %16 = vector.broadcast %cst_4 : f32 to vector<256x16xf32>
    %17 = arith.select %15, %4, %16 : vector<256x16xi1>, vector<256x16xf32>
    %cst_5 = arith.constant dense<0.000000e+00> : vector<256xf32>
    %18 = vector.multi_reduction <add>, %17, %cst_5 [1] : vector<256x16xf32> to vector<256xf32>
    %19 = vector.shape_cast %18 : vector<256xf32> to vector<256x1xf32>
    %20 = arith.subf %19, %6 : vector<256x1xf32>
    %21 = arith.subf %20, %12 : vector<256x1xf32>
    %cst_6 = arith.constant 0.000000e+00 : f32
    %22 = vector.broadcast %cst_6 : f32 to vector<256x1xf32>
    %23 = arith.subf %22, %1 : vector<256x1xf32>
    %24 = arith.mulf %23, %21 : vector<256x1xf32>
    %cst_7 = arith.constant 0.000000e+00 : f32
    %25 = vector.broadcast %cst_7 : f32 to vector<256x1xf32>
    %26 = arith.subf %25, %24 : vector<256x1xf32>
    %27 = math.exp %26 : vector<256x1xf32>
    %cst_8 = arith.constant 1.000000e+00 : f32
    %28 = vector.broadcast %cst_8 : f32 to vector<256x1xf32>
    %29 = arith.subf %28, %27 : vector<256x1xf32>
    %30 = arith.mulf %29, %29 : vector<256x1xf32>
    %cst_9 = arith.constant 1.000000e+00 : f32
    %31 = vector.broadcast %cst_9 : f32 to vector<256x1xf32>
    %32 = arith.mulf %31, %30 : vector<256x1xf32>
    %33 = arith.mulf %32, %24 : vector<256x1xf32>
    %c256_i32 = arith.constant 256 : i32
    %34 = arith.muli %arg0, %c256_i32 : i32
    %35 = tpu.iota {dimensions = array<i32: 0>} : vector<256x1xi32>
    %36 = vector.broadcast %34 : i32 to vector<256x1xi32>
    %37 = arith.addi %36, %35 : vector<256x1xi32>
    %c600_i32 = arith.constant 600 : i32
    %38 = vector.broadcast %c600_i32 : i32 to vector<256x1xi32>
    %39 = arith.cmpi slt, %37, %38 : vector<256x1xi32>
    %cst_10 = arith.constant 0.000000e+00 : f32
    %40 = vector.broadcast %cst_10 : f32 to vector<256x1xf32>
    %41 = arith.select %39, %33, %40 : vector<256x1xi1>, vector<256x1xf32>
    %cst_11 = arith.constant dense<0.000000e+00> : vector<1xf32>
    %42 = vector.multi_reduction <add>, %41, %cst_11 [0] : vector<256x1xf32> to vector<1xf32>
    %43 = vector.shape_cast %42 : vector<1xf32> to vector<1x1xf32>
    %44 = vector.shape_cast %43 : vector<1x1xf32> to vector<1x1x1xf32>
    %c0_12 = arith.constant 0 : index
    %c0_13 = arith.constant 0 : index
    %c0_14 = arith.constant 0 : index
    %45 = vector.load %arg3[%c0_12, %c0_13, %c0_14] : memref<1x1x1xf32, #tpu.memory_space<vmem>>, vector<1x1x1xf32>
    tpu.vector_store %arg3[%c0_12, %c0_13, %c0_14], %44 {strides = array<i32>} : memref<1x1x1xf32, #tpu.memory_space<vmem>>, vector<1x1x1xf32>,
    return
  }
  func.func @transform_0(%arg0: i32) -> (i32, i32) {
    %c0_i32 = arith.constant 0 : i32
    %c0_i32_0 = arith.constant 0 : i32
    return %arg0, %c0_i32 : i32, i32
  }
  func.func @transform_1(%arg0: i32) -> (i32, i32) {
    %c0_i32 = arith.constant 0 : i32
    %c0_i32_0 = arith.constant 0 : i32
    return %arg0, %c0_i32 : i32, i32
  }
  func.func @transform_2(%arg0: i32) -> (i32, i32, i32) {
    %c0_i32 = arith.constant 0 : i32
    %c0_i32_0 = arith.constant 0 : i32
    %c0_i32_1 = arith.constant 0 : i32
    return %arg0, %c0_i32, %c0_i32_0 : i32, i32, i32
  }
}

</mosaic_0001>

<llo_original>
// kernel: tpu_custom_call.1
$region0: #{tpu_custom_call.1}
  #allocation0 [shape = 'u32[]', space=smem, size = 0x4, offset = 0x4, fixed_abs, tag = 'smem constant byte address 0x4 - core index']
  #allocation1 [shape = 'u32[144,128]{1,0:T(1,128)}', space=vmem, size = 0x12000, scoped, tag = 'internal scratch']
  %s0 = inlined_call_operand.vmem [shape: f32[600,16], index: 0, kind: input, shape index: {}]
  %s1 = inlined_call_operand.vmem [shape: f32[600,2], index: 1, kind: input, shape index: {}]
  %s2 = inlined_call_operand.vmem [shape: f32[3,1,1], index: 2, kind: output, shape index: {}]
  %s3 = sld [smem:[#allocation0]]
  $region41: #{tpu_custom_call.1} parent=0
    _
  %s5 = ssub.s32 1, %s3
  %s6 = scalar_select 0, %s5, %s3
  loop: start=0, step=1, limit=5
  $region2: #{tpu_custom_call.1} parent=0 // loop_pre_header
    _
  $region3: #{tpu_custom_call.1} parent=0 // loop_header
    %s8 = sphi 0, %s12
    %p9 = scmp.ge.s32.totalorder %s8, 5
    %s18 = sphi 0, %s20
    %s21 = sphi 0, %s18
    %s22 = sphi 0, %s21
    %s38 = sphi 0, %s22
    %s44 = sphi 0, %s46
    %s47 = sphi 0, %s44
    %s48 = sphi 0, %s47
    %s64 = sphi 0, %s48
    %s70 = sphi 0, %s72
    %s73 = sphi 0, %s70
    %s74 = sphi 0, %s73
    %s90 = sphi 0, %s74
  $region4: #{tpu_custom_call.1} parent=0 // loop_header_branch
    %11 = sbr.rel (%p9) target = $region8
  $region5: #{tpu_custom_call.1} parent=0 // loop_body
    %s13 = ssub.s32 %s8, 1
    %s14 = ssub.s32 %s8, 2
    %s15 = sadd.s32 %s8, 1
    %s16 = ssub.s32 %s8, %s15
    %p17 = scmp.eq.s32.totalorder %s16, 0
    %s19 = sadd.s32 %s18, 1
    %s20 = scalar_select %p17, %s18, %s19
    %p23 = pneg %p17
    %p24 = scmp.eq.s32.totalorder %s8, 2
    %p25 = por %p23, %p24
    %p26 = scmp.ne.s32.totalorder %s18, %s21
    %p27 = scmp.eq.s32.totalorder %s8, 0
    %p28 = por %p26, %p27
    %p29 = scmp.ne.s32.totalorder %s18, %s21
    %p30 = scmp.eq.s32.totalorder %s13, 2
    %p31 = por %p29, %p30
    %p32 = scmp.ne.s32.totalorder %s21, %s22
    %p33 = scmp.eq.s32.totalorder %s13, 0
    %p34 = por %p32, %p33
    %p35 = scmp.ne.s32.totalorder %s21, %s22
    %p36 = scmp.eq.s32.totalorder %s14, 2
    %p37 = por %p35, %p36
    %p39 = scmp.ne.s32.totalorder %s22, %s38
    %p40 = scmp.eq.s32.totalorder %s14, 0
    %p41 = por %p39, %p40
    %s42 = ssub.s32 %s8, %s15
    %p43 = scmp.eq.s32.totalorder %s42, 0
    %s45 = sadd.s32 %s44, 1
    %s46 = scalar_select %p43, %s44, %s45
    %p49 = pneg %p43
    %p50 = scmp.eq.s32.totalorder %s8, 2
    %p51 = por %p49, %p50
    %p52 = scmp.ne.s32.totalorder %s44, %s47
    %p53 = scmp.eq.s32.totalorder %s8, 0
    %p54 = por %p52, %p53
    %p55 = scmp.ne.s32.totalorder %s44, %s47
    %p56 = scmp.eq.s32.totalorder %s13, 2
    %p57 = por %p55, %p56
    %p58 = scmp.ne.s32.totalorder %s47, %s48
    %p59 = scmp.eq.s32.totalorder %s13, 0
    %p60 = por %p58, %p59
    %p61 = scmp.ne.s32.totalorder %s47, %s48
    %p62 = scmp.eq.s32.totalorder %s14, 2
    %p63 = por %p61, %p62
    %p65 = scmp.ne.s32.totalorder %s48, %s64
    %p66 = scmp.eq.s32.totalorder %s14, 0
    %p67 = por %p65, %p66
    %s68 = ssub.s32 %s8, %s15
    %p69 = scmp.eq.s32.totalorder %s68, 0
    %s71 = sadd.s32 %s70, 1
    %s72 = scalar_select %p69, %s70, %s71
    %p75 = pneg %p69
    %p76 = scmp.eq.s32.totalorder %s8, 2
    %p77 = por %p75, %p76
    %p78 = scmp.ne.s32.totalorder %s70, %s73
    %p79 = scmp.eq.s32.totalorder %s8, 0
    %p80 = por %p78, %p79
    %p81 = scmp.ne.s32.totalorder %s70, %s73
    %p82 = scmp.eq.s32.totalorder %s13, 2
    %p83 = por %p81, %p82
    %p84 = scmp.ne.s32.totalorder %s73, %s74
    %p85 = scmp.eq.s32.totalorder %s13, 0
    %p86 = por %p84, %p85
    %p87 = scmp.ne.s32.totalorder %s73, %s74
    %p88 = scmp.eq.s32.totalorder %s14, 2
    %p89 = por %p87, %p88
    %p91 = scmp.ne.s32.totalorder %s74, %s90
    %p92 = scmp.eq.s32.totalorder %s14, 0
    %p93 = por %p91, %p92
    %p94 = scmp.le.s32.totalorder 1, %s8
    %p95 = scmp.lt.s32.totalorder %s8, 4
    %p96 = pnand %p94, %p95
    %p97 = pneg %p96
    // Predicated region
    $region9: #{tpu_custom_call.1} parent=5 // pred_check
      _
    $region10: #{tpu_custom_call.1} parent=5 // pred_check_branch
      %99 = sbr.rel (%p96) target = $region12
    $region11: #{tpu_custom_call.1} parent=5 // pred_region
      %s100 = ssub.s32 %s8, 1
    $region12: #{tpu_custom_call.1} parent=5 // pred_fallthru
      _
    %p101 = scmp.lt.s32.totalorder %s8, 3
    // Predicated region
    $region13: #{tpu_custom_call.1} parent=5 // pred_check
      %p102 = pneg %p101
    $region14: #{tpu_custom_call.1} parent=5 // pred_check_branch
      %104 = sbr.rel (%p102) target = $region16
    $region15: #{tpu_custom_call.1} parent=5 // pred_region
      // Predicated region
      $region17: #{tpu_custom_call.1} parent=15 // pred_check
        %p105 = pneg %p28
      $region18: #{tpu_custom_call.1} parent=15 // pred_check_branch
        %107 = sbr.rel (%p105) target = $region20
      $region19: #{tpu_custom_call.1} parent=15 // pred_region
        %s108 = smul.u32 32, %s8
        %s109 = ssub.s32 75, %s108
        %p110 = scmp.lt.s32.totalorder %s109, 32
        %s111 = scalar_select %p110, %s109, 32
        %s112 = smul.u32 128, %s111
        %p113 = scmp.lt.s32.totalorder %s108, 74
        %s114 = scalar_select %p113, %s108, 74
        %s115 = smul.addr %s114, 8
        %s116 = scalar_lea.vmem %s0, %s115
        %s117 = smul.u32 32, %s8
        %s118 = ssub.s32 75, %s117
        %p119 = scmp.lt.s32.totalorder %s118, 32
        %s120 = scalar_select %p119, %s118, 32
        %s121 = smul.u32 128, %s120
      $region20: #{tpu_custom_call.1} parent=15 // pred_fallthru
        _
      // Predicated region
      $region21: #{tpu_custom_call.1} parent=15 // pred_check
        %p122 = pneg %p54
      $region22: #{tpu_custom_call.1} parent=15 // pred_check_branch
        %124 = sbr.rel (%p122) target = $region24
      $region23: #{tpu_custom_call.1} parent=15 // pred_region
        %s125 = smul.u32 32, %s8
        %s126 = ssub.s32 75, %s125
        %p127 = scmp.lt.s32.totalorder %s126, 32
        %s128 = scalar_select %p127, %s126, 32
        %s129 = smul.u32 128, %s128
        %p130 = scmp.lt.s32.totalorder %s125, 74
        %s131 = scalar_select %p130, %s125, 74
        %s132 = smul.addr %s131, 8
        %s133 = scalar_lea.vmem %s1, %s132
        %s134 = smul.u32 32, %s8
        %s135 = ssub.s32 75, %s134
        %p136 = scmp.lt.s32.totalorder %s135, 32
        %s137 = scalar_select %p136, %s135, 32
        %s138 = smul.u32 128, %s137
      $region24: #{tpu_custom_call.1} parent=15 // pred_fallthru
        _
    $region16: #{tpu_custom_call.1} parent=5 // pred_fallthru
      _
    %p139 = scmp.le.s32.totalorder 1, %s8
    %p140 = scmp.lt.s32.totalorder %s8, 4
    %p141 = pnand %p139, %p140
    %p142 = pneg %p141
    // Predicated region
    $region25: #{tpu_custom_call.1} parent=5 // pred_check
      _
    $region26: #{tpu_custom_call.1} parent=5 // pred_check_branch
      %144 = sbr.rel (%p141) target = $region28
    $region27: #{tpu_custom_call.1} parent=5 // pred_region
      %s145 = ssub.s32 %s8, 1
      %s146 = smul.u32 32, %s13
      %s147 = ssub.s32 75, %s146
      %p148 = scmp.lt.s32.totalorder %s147, 32
      %s149 = scalar_select %p148, %s147, 32
      %s150 = smul.u32 128, %s149
      %p151 = scmp.lt.s32.totalorder %s146, 74
      %s152 = scalar_select %p151, %s146, 74
      %s153 = smul.addr %s152, 8
      %s154 = scalar_lea.vmem %s0, %s153
      %p155 = pneg %p34
      %p156 = pneg %p31
      %s157 = smul.u32 32, %s13
      %s158 = ssub.s32 75, %s157
      %p159 = scmp.lt.s32.totalorder %s158, 32
      %s160 = scalar_select %p159, %s158, 32
      %s161 = smul.u32 128, %s160
      %p162 = scmp.lt.s32.totalorder %s157, 74
      %s163 = scalar_select %p162, %s157, 74
      %s164 = smul.addr %s163, 8
      %s165 = scalar_lea.vmem %s1, %s164
      %p166 = pneg %p60
      %p167 = pneg %p57
      %p168 = pneg %p86
      %p169 = pneg %p83
      %p170 = scmp.lt.s32.totalorder %s13, 2
      %s171 = scalar_select %p170, %s13, 2
      %s172 = scalar_lea.vmem %s2, %s171
      %s173 = smul.u32 32, %s13
      %s174 = ssub.s32 75, %s173
      %p175 = scmp.lt.s32.totalorder %s174, 32
      %s176 = scalar_select %p175, %s174, 32
      %s177 = smul.u32 128, %s176
      %p178 = scmp.lt.s32.totalorder %s173, 74
      %s179 = scalar_select %p178, %s173, 74
      %s180 = smul.addr %s179, 8
      %s181 = scalar_lea.vmem %s0, %s180
      %s182 = smul.u32 32, %s13
      %s183 = ssub.s32 75, %s182
      %p184 = scmp.lt.s32.totalorder %s183, 32
      %s185 = scalar_select %p184, %s183, 32
      %s186 = smul.u32 128, %s185
      %s187 = smul.u32 32, %s13
      %s188 = ssub.s32 75, %s187
      %p189 = scmp.lt.s32.totalorder %s188, 32
      %s190 = scalar_select %p189, %s188, 32
      %s191 = smul.u32 128, %s190
      %p192 = scmp.lt.s32.totalorder %s187, 74
      %s193 = scalar_select %p192, %s187, 74
      %s194 = smul.addr %s193, 8
      %s195 = scalar_lea.vmem %s1, %s194
      %s196 = smul.u32 32, %s13
      %s197 = ssub.s32 75, %s196
      %p198 = scmp.lt.s32.totalorder %s197, 32
      %s199 = scalar_select %p198, %s197, 32
      %s200 = smul.u32 128, %s199
      %p201 = scmp.lt.s32.totalorder %s13, 2
      %s202 = scalar_select %p201, %s13, 2
      %s203 = scalar_lea.vmem %s2, %s202
      %v204 = vld [vmem:[%s195] sm:$0xff]
      %v205 = vld [vmem:[%s195 + $0x8] sm:$0xff]
      %v206 = vld [vmem:[%s195 + $0x10] sm:$0xff]
      %v207 = vld [vmem:[%s195 + $0x18] sm:$0xff]
      %v208 = vld [vmem:[%s195 + $0x20] sm:$0xff]
      %v209 = vld [vmem:[%s195 + $0x28] sm:$0xff]
      %v210 = vld [vmem:[%s195 + $0x30] sm:$0xff]
      %v211 = vld [vmem:[%s195 + $0x38] sm:$0xff]
      %v212 = vld [vmem:[%s195 + $0x40] sm:$0xff]
      %v213 = vld [vmem:[%s195 + $0x48] sm:$0xff]
      %v214 = vld [vmem:[%s195 + $0x50] sm:$0xff]
      %v215 = vld [vmem:[%s195 + $0x58] sm:$0xff]
      %v216 = vld [vmem:[%s195 + $0x60] sm:$0xff]
      %v217 = vld [vmem:[%s195 + $0x68] sm:$0xff]
      %v218 = vld [vmem:[%s195 + $0x70] sm:$0xff]
      %v219 = vld [vmem:[%s195 + $0x78] sm:$0xff]
      %v220 = vld [vmem:[%s195 + $0x80] sm:$0xff]
      %v221 = vld [vmem:[%s195 + $0x88] sm:$0xff]
      %v222 = vld [vmem:[%s195 + $0x90] sm:$0xff]
      %v223 = vld [vmem:[%s195 + $0x98] sm:$0xff]
      %v224 = vld [vmem:[%s195 + $0xa0] sm:$0xff]
      %v225 = vld [vmem:[%s195 + $0xa8] sm:$0xff]
      %v226 = vld [vmem:[%s195 + $0xb0] sm:$0xff]
      %v227 = vld [vmem:[%s195 + $0xb8] sm:$0xff]
      %v228 = vld [vmem:[%s195 + $0xc0] sm:$0xff]
      %v229 = vld [vmem:[%s195 + $0xc8] sm:$0xff]
      %v230 = vld [vmem:[%s195 + $0xd0] sm:$0xff]
      %v231 = vld [vmem:[%s195 + $0xd8] sm:$0xff]
      %v232 = vld [vmem:[%s195 + $0xe0] sm:$0xff]
      %v233 = vld [vmem:[%s195 + $0xe8] sm:$0xff]
      %v234 = vld [vmem:[%s195 + $0xf0] sm:$0xff]
      %v235 = vld [vmem:[%s195 + $0xf8] sm:$0xff]
      %v236 = vcvt.f32.s32.to.zero.pseudo %v204
      %v237 = vcvt.f32.s32.to.zero.pseudo %v205
      %v238 = vcvt.f32.s32.to.zero.pseudo %v206
      %v239 = vcvt.f32.s32.to.zero.pseudo %v207
      %v240 = vcvt.f32.s32.to.zero.pseudo %v208
      %v241 = vcvt.f32.s32.to.zero.pseudo %v209
      %v242 = vcvt.f32.s32.to.zero.pseudo %v210
      %v243 = vcvt.f32.s32.to.zero.pseudo %v211
      %v244 = vcvt.f32.s32.to.zero.pseudo %v212
      %v245 = vcvt.f32.s32.to.zero.pseudo %v213
      %v246 = vcvt.f32.s32.to.zero.pseudo %v214
      %v247 = vcvt.f32.s32.to.zero.pseudo %v215
      %v248 = vcvt.f32.s32.to.zero.pseudo %v216
      %v249 = vcvt.f32.s32.to.zero.pseudo %v217
      %v250 = vcvt.f32.s32.to.zero.pseudo %v218
      %v251 = vcvt.f32.s32.to.zero.pseudo %v219
      %v252 = vcvt.f32.s32.to.zero.pseudo %v220
      %v253 = vcvt.f32.s32.to.zero.pseudo %v221
      %v254 = vcvt.f32.s32.to.zero.pseudo %v222
      %v255 = vcvt.f32.s32.to.zero.pseudo %v223
      %v256 = vcvt.f32.s32.to.zero.pseudo %v224
      %v257 = vcvt.f32.s32.to.zero.pseudo %v225
      %v258 = vcvt.f32.s32.to.zero.pseudo %v226
      %v259 = vcvt.f32.s32.to.zero.pseudo %v227
      %v260 = vcvt.f32.s32.to.zero.pseudo %v228
      %v261 = vcvt.f32.s32.to.zero.pseudo %v229
      %v262 = vcvt.f32.s32.to.zero.pseudo %v230
      %v263 = vcvt.f32.s32.to.zero.pseudo %v231
      %v264 = vcvt.f32.s32.to.zero.pseudo %v232
      %v265 = vcvt.f32.s32.to.zero.pseudo %v233
      %v266 = vcvt.f32.s32.to.zero.pseudo %v234
      %v267 = vcvt.f32.s32.to.zero.pseudo %v235
      %v268 = vld [vmem:[%s181] sm:$0xff]
      %v269 = vld [vmem:[%s181 + $0x8] sm:$0xff]
      %v270 = vld [vmem:[%s181 + $0x10] sm:$0xff]
      %v271 = vld [vmem:[%s181 + $0x18] sm:$0xff]
      %v272 = vld [vmem:[%s181 + $0x20] sm:$0xff]
      %v273 = vld [vmem:[%s181 + $0x28] sm:$0xff]
      %v274 = vld [vmem:[%s181 + $0x30] sm:$0xff]
      %v275 = vld [vmem:[%s181 + $0x38] sm:$0xff]
      %v276 = vld [vmem:[%s181 + $0x40] sm:$0xff]
      %v277 = vld [vmem:[%s181 + $0x48] sm:$0xff]
      %v278 = vld [vmem:[%s181 + $0x50] sm:$0xff]
      %v279 = vld [vmem:[%s181 + $0x58] sm:$0xff]
      %v280 = vld [vmem:[%s181 + $0x60] sm:$0xff]
      %v281 = vld [vmem:[%s181 + $0x68] sm:$0xff]
      %v282 = vld [vmem:[%s181 + $0x70] sm:$0xff]
      %v283 = vld [vmem:[%s181 + $0x78] sm:$0xff]
      %v284 = vld [vmem:[%s181 + $0x80] sm:$0xff]
      %v285 = vld [vmem:[%s181 + $0x88] sm:$0xff]
      %v286 = vld [vmem:[%s181 + $0x90] sm:$0xff]
      %v287 = vld [vmem:[%s181 + $0x98] sm:$0xff]
      %v288 = vld [vmem:[%s181 + $0xa0] sm:$0xff]
      %v289 = vld [vmem:[%s181 + $0xa8] sm:$0xff]
      %v290 = vld [vmem:[%s181 + $0xb0] sm:$0xff]
      %v291 = vld [vmem:[%s181 + $0xb8] sm:$0xff]
      %v292 = vld [vmem:[%s181 + $0xc0] sm:$0xff]
      %v293 = vld [vmem:[%s181 + $0xc8] sm:$0xff]
      %v294 = vld [vmem:[%s181 + $0xd0] sm:$0xff]
      %v295 = vld [vmem:[%s181 + $0xd8] sm:$0xff]
      %v296 = vld [vmem:[%s181 + $0xe0] sm:$0xff]
      %v297 = vld [vmem:[%s181 + $0xe8] sm:$0xff]
      %v298 = vld [vmem:[%s181 + $0xf0] sm:$0xff]
      %v299 = vld [vmem:[%s181 + $0xf8] sm:$0xff]
      %vm300 = vcmask 130048
      %v301 = vsel %vm300, %v268, -inf
      %302 = vmax.xlane.f32.xlu0 %v301
      %v303 = vpop.xlane.xlu0 %302
      %v304 = vsel %vm300, %v269, -inf
      %305 = vmax.xlane.f32.xlu0 %v304
      %v306 = vpop.xlane.xlu0 %305
      %v307 = vsel %vm300, %v270, -inf
      %308 = vmax.xlane.f32.xlu0 %v307
      %v309 = vpop.xlane.xlu0 %308
      %v310 = vsel %vm300, %v271, -inf
      %311 = vmax.xlane.f32.xlu0 %v310
      %v312 = vpop.xlane.xlu0 %311
      %v313 = vsel %vm300, %v272, -inf
      %314 = vmax.xlane.f32.xlu0 %v313
      %v315 = vpop.xlane.xlu0 %314
      %v316 = vsel %vm300, %v273, -inf
      %317 = vmax.xlane.f32.xlu0 %v316
      %v318 = vpop.xlane.xlu0 %317
      %v319 = vsel %vm300, %v274, -inf
      %320 = vmax.xlane.f32.xlu0 %v319
      %v321 = vpop.xlane.xlu0 %320
      %v322 = vsel %vm300, %v275, -inf
      %323 = vmax.xlane.f32.xlu0 %v322
      %v324 = vpop.xlane.xlu0 %323
      %v325 = vsel %vm300, %v276, -inf
      %326 = vmax.xlane.f32.xlu0 %v325
      %v327 = vpop.xlane.xlu0 %326
      %v328 = vsel %vm300, %v277, -inf
      %329 = vmax.xlane.f32.xlu0 %v328
      %v330 = vpop.xlane.xlu0 %329
      %v331 = vsel %vm300, %v278, -inf
      %332 = vmax.xlane.f32.xlu0 %v331
      %v333 = vpop.xlane.xlu0 %332
      %v334 = vsel %vm300, %v279, -inf
      %335 = vmax.xlane.f32.xlu0 %v334
      %v336 = vpop.xlane.xlu0 %335
      %v337 = vsel %vm300, %v280, -inf
      %338 = vmax.xlane.f32.xlu0 %v337
      %v339 = vpop.xlane.xlu0 %338
      %v340 = vsel %vm300, %v281, -inf
      %341 = vmax.xlane.f32.xlu0 %v340
      %v342 = vpop.xlane.xlu0 %341
      %v343 = vsel %vm300, %v282, -inf
      %344 = vmax.xlane.f32.xlu0 %v343
      %v345 = vpop.xlane.xlu0 %344
      %v346 = vsel %vm300, %v283, -inf
      %347 = vmax.xlane.f32.xlu0 %v346
      %v348 = vpop.xlane.xlu0 %347
      %v349 = vsel %vm300, %v284, -inf
      %350 = vmax.xlane.f32.xlu0 %v349
      %v351 = vpop.xlane.xlu0 %350
      %v352 = vsel %vm300, %v285, -inf
      %353 = vmax.xlane.f32.xlu0 %v352
      %v354 = vpop.xlane.xlu0 %353
      %v355 = vsel %vm300, %v286, -inf
      %356 = vmax.xlane.f32.xlu0 %v355
      %v357 = vpop.xlane.xlu0 %356
      %v358 = vsel %vm300, %v287, -inf
      %359 = vmax.xlane.f32.xlu0 %v358
      %v360 = vpop.xlane.xlu0 %359
      %v361 = vsel %vm300, %v288, -inf
      %362 = vmax.xlane.f32.xlu0 %v361
      %v363 = vpop.xlane.xlu0 %362
      %v364 = vsel %vm300, %v289, -inf
      %365 = vmax.xlane.f32.xlu0 %v364
      %v366 = vpop.xlane.xlu0 %365
      %v367 = vsel %vm300, %v290, -inf
      %368 = vmax.xlane.f32.xlu0 %v367
      %v369 = vpop.xlane.xlu0 %368
      %v370 = vsel %vm300, %v291, -inf
      %371 = vmax.xlane.f32.xlu0 %v370
      %v372 = vpop.xlane.xlu0 %371
      %v373 = vsel %vm300, %v292, -inf
      %374 = vmax.xlane.f32.xlu0 %v373
      %v375 = vpop.xlane.xlu0 %374
      %v376 = vsel %vm300, %v293, -inf
      %377 = vmax.xlane.f32.xlu0 %v376
      %v378 = vpop.xlane.xlu0 %377
      %v379 = vsel %vm300, %v294, -inf
      %380 = vmax.xlane.f32.xlu0 %v379
      %v381 = vpop.xlane.xlu0 %380
      %v382 = vsel %vm300, %v295, -inf
      %383 = vmax.xlane.f32.xlu0 %v382
      %v384 = vpop.xlane.xlu0 %383
      %v385 = vsel %vm300, %v296, -inf
      %386 = vmax.xlane.f32.xlu0 %v385
      %v387 = vpop.xlane.xlu0 %386
      %v388 = vsel %vm300, %v297, -inf
      %389 = vmax.xlane.f32.xlu0 %v388
      %v390 = vpop.xlane.xlu0 %389
      %v391 = vsel %vm300, %v298, -inf
      %392 = vmax.xlane.f32.xlu0 %v391
      %v393 = vpop.xlane.xlu0 %392
      %v394 = vsel %vm300, %v299, -inf
      %395 = vmax.xlane.f32.xlu0 %v394
      %v396 = vpop.xlane.xlu0 %395
      %v397 = vsub.f32 %v268, %v303
      %v398 = vsub.f32 %v269, %v306
      %v399 = vsub.f32 %v270, %v309
      %v400 = vsub.f32 %v271, %v312
      %v401 = vsub.f32 %v272, %v315
      %v402 = vsub.f32 %v273, %v318
      %v403 = vsub.f32 %v274, %v321
      %v404 = vsub.f32 %v275, %v324
      %v405 = vsub.f32 %v276, %v327
      %v406 = vsub.f32 %v277, %v330
      %v407 = vsub.f32 %v278, %v333
      %v408 = vsub.f32 %v279, %v336
      %v409 = vsub.f32 %v280, %v339
      %v410 = vsub.f32 %v281, %v342
      %v411 = vsub.f32 %v282, %v345
      %v412 = vsub.f32 %v283, %v348
      %v413 = vsub.f32 %v284, %v351
      %v414 = vsub.f32 %v285, %v354
      %v415 = vsub.f32 %v286, %v357
      %v416 = vsub.f32 %v287, %v360
      %v417 = vsub.f32 %v288, %v363
      %v418 = vsub.f32 %v289, %v366
      %v419 = vsub.f32 %v290, %v369
      %v420 = vsub.f32 %v291, %v372
      %v421 = vsub.f32 %v292, %v375
      %v422 = vsub.f32 %v293, %v378
      %v423 = vsub.f32 %v294, %v381
      %v424 = vsub.f32 %v295, %v384
      %v425 = vsub.f32 %v296, %v387
      %v426 = vsub.f32 %v297, %v390
      %v427 = vsub.f32 %v298, %v393
      %v428 = vsub.f32 %v299, %v396
      %v429 = vmul.f32 %v397, 1.442695
      %v430 = vpow.pop %v429
      %v431 = vmul.f32 %v398, 1.442695
      %v432 = vpow.pop %v431
      %v433 = vmul.f32 %v399, 1.442695
      %v434 = vpow.pop %v433
      %v435 = vmul.f32 %v400, 1.442695
      %v436 = vpow.pop %v435
      %v437 = vmul.f32 %v401, 1.442695
      %v438 = vpow.pop %v437
      %v439 = vmul.f32 %v402, 1.442695
      %v440 = vpow.pop %v439
      %v441 = vmul.f32 %v403, 1.442695
      %v442 = vpow.pop %v441
      %v443 = vmul.f32 %v404, 1.442695
      %v444 = vpow.pop %v443
      %v445 = vmul.f32 %v405, 1.442695
      %v446 = vpow.pop %v445
      %v447 = vmul.f32 %v406, 1.442695
      %v448 = vpow.pop %v447
      %v449 = vmul.f32 %v407, 1.442695
      %v450 = vpow.pop %v449
      %v451 = vmul.f32 %v408, 1.442695
      %v452 = vpow.pop %v451
      %v453 = vmul.f32 %v409, 1.442695
      %v454 = vpow.pop %v453
      %v455 = vmul.f32 %v410, 1.442695
      %v456 = vpow.pop %v455
      %v457 = vmul.f32 %v411, 1.442695
      %v458 = vpow.pop %v457
      %v459 = vmul.f32 %v412, 1.442695
      %v460 = vpow.pop %v459
      %v461 = vmul.f32 %v413, 1.442695
      %v462 = vpow.pop %v461
      %v463 = vmul.f32 %v414, 1.442695
      %v464 = vpow.pop %v463
      %v465 = vmul.f32 %v415, 1.442695
      %v466 = vpow.pop %v465
      %v467 = vmul.f32 %v416, 1.442695
      %v468 = vpow.pop %v467
      %v469 = vmul.f32 %v417, 1.442695
      %v470 = vpow.pop %v469
      %v471 = vmul.f32 %v418, 1.442695
      %v472 = vpow.pop %v471
      %v473 = vmul.f32 %v419, 1.442695
      %v474 = vpow.pop %v473
      %v475 = vmul.f32 %v420, 1.442695
      %v476 = vpow.pop %v475
      %v477 = vmul.f32 %v421, 1.442695
      %v478 = vpow.pop %v477
      %v479 = vmul.f32 %v422, 1.442695
      %v480 = vpow.pop %v479
      %v481 = vmul.f32 %v423, 1.442695
      %v482 = vpow.pop %v481
      %v483 = vmul.f32 %v424, 1.442695
      %v484 = vpow.pop %v483
      %v485 = vmul.f32 %v425, 1.442695
      %v486 = vpow.pop %v485
      %v487 = vmul.f32 %v426, 1.442695
      %v488 = vpow.pop %v487
      %v489 = vmul.f32 %v427, 1.442695
      %v490 = vpow.pop %v489
      %v491 = vmul.f32 %v428, 1.442695
      %v492 = vpow.pop %v491
      %v493 = vsel %vm300, %v430, 0.0
      %494 = vadd.xlane.f32.xlu0 %v493
      %v495 = vpop.xlane.xlu0 %494
      %v496 = vsel %vm300, %v432, 0.0
      %497 = vadd.xlane.f32.xlu0 %v496
      %v498 = vpop.xlane.xlu0 %497
      %v499 = vsel %vm300, %v434, 0.0
      %500 = vadd.xlane.f32.xlu0 %v499
      %v501 = vpop.xlane.xlu0 %500
      %v502 = vsel %vm300, %v436, 0.0
      %503 = vadd.xlane.f32.xlu0 %v502
      %v504 = vpop.xlane.xlu0 %503
      %v505 = vsel %vm300, %v438, 0.0
      %506 = vadd.xlane.f32.xlu0 %v505
      %v507 = vpop.xlane.xlu0 %506
      %v508 = vsel %vm300, %v440, 0.0
      %509 = vadd.xlane.f32.xlu0 %v508
      %v510 = vpop.xlane.xlu0 %509
      %v511 = vsel %vm300, %v442, 0.0
      %512 = vadd.xlane.f32.xlu0 %v511
      %v513 = vpop.xlane.xlu0 %512
      %v514 = vsel %vm300, %v444, 0.0
      %515 = vadd.xlane.f32.xlu0 %v514
      %v516 = vpop.xlane.xlu0 %515
      %v517 = vsel %vm300, %v446, 0.0
      %518 = vadd.xlane.f32.xlu0 %v517
      %v519 = vpop.xlane.xlu0 %518
      %v520 = vsel %vm300, %v448, 0.0
      %521 = vadd.xlane.f32.xlu0 %v520
      %v522 = vpop.xlane.xlu0 %521
      %v523 = vsel %vm300, %v450, 0.0
      %524 = vadd.xlane.f32.xlu0 %v523
      %v525 = vpop.xlane.xlu0 %524
      %v526 = vsel %vm300, %v452, 0.0
      %527 = vadd.xlane.f32.xlu0 %v526
      %v528 = vpop.xlane.xlu0 %527
      %v529 = vsel %vm300, %v454, 0.0
      %530 = vadd.xlane.f32.xlu0 %v529
      %v531 = vpop.xlane.xlu0 %530
      %v532 = vsel %vm300, %v456, 0.0
      %533 = vadd.xlane.f32.xlu0 %v532
      %v534 = vpop.xlane.xlu0 %533
      %v535 = vsel %vm300, %v458, 0.0
      %536 = vadd.xlane.f32.xlu0 %v535
      %v537 = vpop.xlane.xlu0 %536
      %v538 = vsel %vm300, %v460, 0.0
      %539 = vadd.xlane.f32.xlu0 %v538
      %v540 = vpop.xlane.xlu0 %539
      %v541 = vsel %vm300, %v462, 0.0
      %542 = vadd.xlane.f32.xlu0 %v541
      %v543 = vpop.xlane.xlu0 %542
      %v544 = vsel %vm300, %v464, 0.0
      %545 = vadd.xlane.f32.xlu0 %v544
      %v546 = vpop.xlane.xlu0 %545
      %v547 = vsel %vm300, %v466, 0.0
      %548 = vadd.xlane.f32.xlu0 %v547
      %v549 = vpop.xlane.xlu0 %548
      %v550 = vsel %vm300, %v468, 0.0
      %551 = vadd.xlane.f32.xlu0 %v550
      %v552 = vpop.xlane.xlu0 %551
      %v553 = vsel %vm300, %v470, 0.0
      %554 = vadd.xlane.f32.xlu0 %v553
      %v555 = vpop.xlane.xlu0 %554
      %v556 = vsel %vm300, %v472, 0.0
      %557 = vadd.xlane.f32.xlu0 %v556
      %v558 = vpop.xlane.xlu0 %557
      %v559 = vsel %vm300, %v474, 0.0
      %560 = vadd.xlane.f32.xlu0 %v559
      %v561 = vpop.xlane.xlu0 %560
      %v562 = vsel %vm300, %v476, 0.0
      %563 = vadd.xlane.f32.xlu0 %v562
      %v564 = vpop.xlane.xlu0 %563
      %v565 = vsel %vm300, %v478, 0.0
      %566 = vadd.xlane.f32.xlu0 %v565
      %v567 = vpop.xlane.xlu0 %566
      %v568 = vsel %vm300, %v480, 0.0
      %569 = vadd.xlane.f32.xlu0 %v568
      %v570 = vpop.xlane.xlu0 %569
      %v571 = vsel %vm300, %v482, 0.0
      %572 = vadd.xlane.f32.xlu0 %v571
      %v573 = vpop.xlane.xlu0 %572
      %v574 = vsel %vm300, %v484, 0.0
      %575 = vadd.xlane.f32.xlu0 %v574
      %v576 = vpop.xlane.xlu0 %575
      %v577 = vsel %vm300, %v486, 0.0
      %578 = vadd.xlane.f32.xlu0 %v577
      %v579 = vpop.xlane.xlu0 %578
      %v580 = vsel %vm300, %v488, 0.0
      %581 = vadd.xlane.f32.xlu0 %v580
      %v582 = vpop.xlane.xlu0 %581
      %v583 = vsel %vm300, %v490, 0.0
      %584 = vadd.xlane.f32.xlu0 %v583
      %v585 = vpop.xlane.xlu0 %584
      %v586 = vsel %vm300, %v492, 0.0
      %587 = vadd.xlane.f32.xlu0 %v586
      %v588 = vpop.xlane.xlu0 %587
      %v589 = vlog2.pop %v495
      %v590 = vmul.f32 %v589, 0.6931472
      %v591 = vlog2.pop %v498
      %v592 = vmul.f32 %v591, 0.6931472
      %v593 = vlog2.pop %v501
      %v594 = vmul.f32 %v593, 0.6931472
      %v595 = vlog2.pop %v504
      %v596 = vmul.f32 %v595, 0.6931472
      %v597 = vlog2.pop %v507
      %v598 = vmul.f32 %v597, 0.6931472
      %v599 = vlog2.pop %v510
      %v600 = vmul.f32 %v599, 0.6931472
      %v601 = vlog2.pop %v513
      %v602 = vmul.f32 %v601, 0.6931472
      %v603 = vlog2.pop %v516
      %v604 = vmul.f32 %v603, 0.6931472
      %v605 = vlog2.pop %v519
      %v606 = vmul.f32 %v605, 0.6931472
      %v607 = vlog2.pop %v522
      %v608 = vmul.f32 %v607, 0.6931472
      %v609 = vlog2.pop %v525
      %v610 = vmul.f32 %v609, 0.6931472
      %v611 = vlog2.pop %v528
      %v612 = vmul.f32 %v611, 0.6931472
      %v613 = vlog2.pop %v531
      %v614 = vmul.f32 %v613, 0.6931472
      %v615 = vlog2.pop %v534
      %v616 = vmul.f32 %v615, 0.6931472
      %v617 = vlog2.pop %v537
      %v618 = vmul.f32 %v617, 0.6931472
      %v619 = vlog2.pop %v540
      %v620 = vmul.f32 %v619, 0.6931472
      %v621 = vlog2.pop %v543
      %v622 = vmul.f32 %v621, 0.6931472
      %v623 = vlog2.pop %v546
      %v624 = vmul.f32 %v623, 0.6931472
      %v625 = vlog2.pop %v549
      %v626 = vmul.f32 %v625, 0.6931472
      %v627 = vlog2.pop %v552
      %v628 = vmul.f32 %v627, 0.6931472
      %v629 = vlog2.pop %v555
      %v630 = vmul.f32 %v629, 0.6931472
      %v631 = vlog2.pop %v558
      %v632 = vmul.f32 %v631, 0.6931472
      %v633 = vlog2.pop %v561
      %v634 = vmul.f32 %v633, 0.6931472
      %v635 = vlog2.pop %v564
      %v636 = vmul.f32 %v635, 0.6931472
      %v637 = vlog2.pop %v567
      %v638 = vmul.f32 %v637, 0.6931472
      %v639 = vlog2.pop %v570
      %v640 = vmul.f32 %v639, 0.6931472
      %v641 = vlog2.pop %v573
      %v642 = vmul.f32 %v641, 0.6931472
      %v643 = vlog2.pop %v576
      %v644 = vmul.f32 %v643, 0.6931472
      %v645 = vlog2.pop %v579
      %v646 = vmul.f32 %v645, 0.6931472
      %v647 = vlog2.pop %v582
      %v648 = vmul.f32 %v647, 0.6931472
      %v649 = vlog2.pop %v585
      %v650 = vmul.f32 %v649, 0.6931472
      %v651 = vlog2.pop %v588
      %v652 = vmul.f32 %v651, 0.6931472
      %v653 = vlaneseq
      %v654 = vand.u32 %v653, 127
      %655 = vset.pattern.permute.xlu0 1
      %656 = vperm.xlu0 %655, %v236
      %v657 = vpop.permute.xlu0 %656
      %658 = vset.pattern.permute.xlu0 1
      %659 = vperm.xlu0 %658, %v237
      %v660 = vpop.permute.xlu0 %659
      %661 = vset.pattern.permute.xlu0 1
      %662 = vperm.xlu0 %661, %v238
      %v663 = vpop.permute.xlu0 %662
      %664 = vset.pattern.permute.xlu0 1
      %665 = vperm.xlu0 %664, %v239
      %v666 = vpop.permute.xlu0 %665
      %667 = vset.pattern.permute.xlu0 1
      %668 = vperm.xlu0 %667, %v240
      %v669 = vpop.permute.xlu0 %668
      %670 = vset.pattern.permute.xlu0 1
      %671 = vperm.xlu0 %670, %v241
      %v672 = vpop.permute.xlu0 %671
      %673 = vset.pattern.permute.xlu0 1
      %674 = vperm.xlu0 %673, %v242
      %v675 = vpop.permute.xlu0 %674
      %676 = vset.pattern.permute.xlu0 1
      %677 = vperm.xlu0 %676, %v243
      %v678 = vpop.permute.xlu0 %677
      %679 = vset.pattern.permute.xlu0 1
      %680 = vperm.xlu0 %679, %v244
      %v681 = vpop.permute.xlu0 %680
      %682 = vset.pattern.permute.xlu0 1
      %683 = vperm.xlu0 %682, %v245
      %v684 = vpop.permute.xlu0 %683
      %685 = vset.pattern.permute.xlu0 1
      %686 = vperm.xlu0 %685, %v246
      %v687 = vpop.permute.xlu0 %686
      %688 = vset.pattern.permute.xlu0 1
      %689 = vperm.xlu0 %688, %v247
      %v690 = vpop.permute.xlu0 %689
      %691 = vset.pattern.permute.xlu0 1
      %692 = vperm.xlu0 %691, %v248
      %v693 = vpop.permute.xlu0 %692
      %694 = vset.pattern.permute.xlu0 1
      %695 = vperm.xlu0 %694, %v249
      %v696 = vpop.permute.xlu0 %695
      %697 = vset.pattern.permute.xlu0 1
      %698 = vperm.xlu0 %697, %v250
      %v699 = vpop.permute.xlu0 %698
      %700 = vset.pattern.permute.xlu0 1
      %701 = vperm.xlu0 %700, %v251
      %v702 = vpop.permute.xlu0 %701
      %703 = vset.pattern.permute.xlu0 1
      %704 = vperm.xlu0 %703, %v252
      %v705 = vpop.permute.xlu0 %704
      %706 = vset.pattern.permute.xlu0 1
      %707 = vperm.xlu0 %706, %v253
      %v708 = vpop.permute.xlu0 %707
      %709 = vset.pattern.permute.xlu0 1
      %710 = vperm.xlu0 %709, %v254
      %v711 = vpop.permute.xlu0 %710
      %712 = vset.pattern.permute.xlu0 1
      %713 = vperm.xlu0 %712, %v255
      %v714 = vpop.permute.xlu0 %713
      %715 = vset.pattern.permute.xlu0 1
      %716 = vperm.xlu0 %715, %v256
      %v717 = vpop.permute.xlu0 %716
      %718 = vset.pattern.permute.xlu0 1
      %719 = vperm.xlu0 %718, %v257
      %v720 = vpop.permute.xlu0 %719
      %721 = vset.pattern.permute.xlu0 1
      %722 = vperm.xlu0 %721, %v258
      %v723 = vpop.permute.xlu0 %722
      %724 = vset.pattern.permute.xlu0 1
      %725 = vperm.xlu0 %724, %v259
      %v726 = vpop.permute.xlu0 %725
      %727 = vset.pattern.permute.xlu0 1
      %728 = vperm.xlu0 %727, %v260
      %v729 = vpop.permute.xlu0 %728
      %730 = vset.pattern.permute.xlu0 1
      %731 = vperm.xlu0 %730, %v261
      %v732 = vpop.permute.xlu0 %731
      %733 = vset.pattern.permute.xlu0 1
      %734 = vperm.xlu0 %733, %v262
      %v735 = vpop.permute.xlu0 %734
      %736 = vset.pattern.permute.xlu0 1
      %737 = vperm.xlu0 %736, %v263
      %v738 = vpop.permute.xlu0 %737
      %739 = vset.pattern.permute.xlu0 1
      %740 = vperm.xlu0 %739, %v264
      %v741 = vpop.permute.xlu0 %740
      %742 = vset.pattern.permute.xlu0 1
      %743 = vperm.xlu0 %742, %v265
      %v744 = vpop.permute.xlu0 %743
      %745 = vset.pattern.permute.xlu0 1
      %746 = vperm.xlu0 %745, %v266
      %v747 = vpop.permute.xlu0 %746
      %748 = vset.pattern.permute.xlu0 1
      %749 = vperm.xlu0 %748, %v267
      %v750 = vpop.permute.xlu0 %749
      %vm751 = vcmp.eq.s32.totalorder %v654, %v657
      %vm752 = vcmp.eq.s32.totalorder %v654, %v660
      %vm753 = vcmp.eq.s32.totalorder %v654, %v663
      %vm754 = vcmp.eq.s32.totalorder %v654, %v666
      %vm755 = vcmp.eq.s32.totalorder %v654, %v669
      %vm756 = vcmp.eq.s32.totalorder %v654, %v672
      %vm757 = vcmp.eq.s32.totalorder %v654, %v675
      %vm758 = vcmp.eq.s32.totalorder %v654, %v678
      %vm759 = vcmp.eq.s32.totalorder %v654, %v681
      %vm760 = vcmp.eq.s32.totalorder %v654, %v684
      %vm761 = vcmp.eq.s32.totalorder %v654, %v687
      %vm762 = vcmp.eq.s32.totalorder %v654, %v690
      %vm763 = vcmp.eq.s32.totalorder %v654, %v693
      %vm764 = vcmp.eq.s32.totalorder %v654, %v696
      %vm765 = vcmp.eq.s32.totalorder %v654, %v699
      %vm766 = vcmp.eq.s32.totalorder %v654, %v702
      %vm767 = vcmp.eq.s32.totalorder %v654, %v705
      %vm768 = vcmp.eq.s32.totalorder %v654, %v708
      %vm769 = vcmp.eq.s32.totalorder %v654, %v711
      %vm770 = vcmp.eq.s32.totalorder %v654, %v714
      %vm771 = vcmp.eq.s32.totalorder %v654, %v717
      %vm772 = vcmp.eq.s32.totalorder %v654, %v720
      %vm773 = vcmp.eq.s32.totalorder %v654, %v723
      %vm774 = vcmp.eq.s32.totalorder %v654, %v726
      %vm775 = vcmp.eq.s32.totalorder %v654, %v729
      %vm776 = vcmp.eq.s32.totalorder %v654, %v732
      %vm777 = vcmp.eq.s32.totalorder %v654, %v735
      %vm778 = vcmp.eq.s32.totalorder %v654, %v738
      %vm779 = vcmp.eq.s32.totalorder %v654, %v741
      %vm780 = vcmp.eq.s32.totalorder %v654, %v744
      %vm781 = vcmp.eq.s32.totalorder %v654, %v747
      %vm782 = vcmp.eq.s32.totalorder %v654, %v750
      %v783 = vsel %vm751, %v268, 0.0
      %v784 = vsel %vm752, %v269, 0.0
      %v785 = vsel %vm753, %v270, 0.0
      %v786 = vsel %vm754, %v271, 0.0
      %v787 = vsel %vm755, %v272, 0.0
      %v788 = vsel %vm756, %v273, 0.0
      %v789 = vsel %vm757, %v274, 0.0
      %v790 = vsel %vm758, %v275, 0.0
      %v791 = vsel %vm759, %v276, 0.0
      %v792 = vsel %vm760, %v277, 0.0
      %v793 = vsel %vm761, %v278, 0.0
      %v794 = vsel %vm762, %v279, 0.0
      %v795 = vsel %vm763, %v280, 0.0
      %v796 = vsel %vm764, %v281, 0.0
      %v797 = vsel %vm765, %v282, 0.0
      %v798 = vsel %vm766, %v283, 0.0
      %v799 = vsel %vm767, %v284, 0.0
      %v800 = vsel %vm768, %v285, 0.0
      %v801 = vsel %vm769, %v286, 0.0
      %v802 = vsel %vm770, %v287, 0.0
      %v803 = vsel %vm771, %v288, 0.0
      %v804 = vsel %vm772, %v289, 0.0
      %v805 = vsel %vm773, %v290, 0.0
      %v806 = vsel %vm774, %v291, 0.0
      %v807 = vsel %vm775, %v292, 0.0
      %v808 = vsel %vm776, %v293, 0.0
      %v809 = vsel %vm777, %v294, 0.0
      %v810 = vsel %vm778, %v295, 0.0
      %v811 = vsel %vm779, %v296, 0.0
      %v812 = vsel %vm780, %v297, 0.0
      %v813 = vsel %vm781, %v298, 0.0
      %v814 = vsel %vm782, %v299, 0.0
      %v815 = vsel %vm300, %v783, 0.0
      %816 = vadd.xlane.f32.xlu0 %v815
      %v817 = vpop.xlane.xlu0 %816
      %v818 = vsel %vm300, %v784, 0.0
      %819 = vadd.xlane.f32.xlu0 %v818
      %v820 = vpop.xlane.xlu0 %819
      %v821 = vsel %vm300, %v785, 0.0
      %822 = vadd.xlane.f32.xlu0 %v821
      %v823 = vpop.xlane.xlu0 %822
      %v824 = vsel %vm300, %v786, 0.0
      %825 = vadd.xlane.f32.xlu0 %v824
      %v826 = vpop.xlane.xlu0 %825
      %v827 = vsel %vm300, %v787, 0.0
      %828 = vadd.xlane.f32.xlu0 %v827
      %v829 = vpop.xlane.xlu0 %828
      %v830 = vsel %vm300, %v788, 0.0
      %831 = vadd.xlane.f32.xlu0 %v830
      %v832 = vpop.xlane.xlu0 %831
      %v833 = vsel %vm300, %v789, 0.0
      %834 = vadd.xlane.f32.xlu0 %v833
      %v835 = vpop.xlane.xlu0 %834
      %v836 = vsel %vm300, %v790, 0.0
      %837 = vadd.xlane.f32.xlu0 %v836
      %v838 = vpop.xlane.xlu0 %837
      %v839 = vsel %vm300, %v791, 0.0
      %840 = vadd.xlane.f32.xlu0 %v839
      %v841 = vpop.xlane.xlu0 %840
      %v842 = vsel %vm300, %v792, 0.0
      %843 = vadd.xlane.f32.xlu0 %v842
      %v844 = vpop.xlane.xlu0 %843
      %v845 = vsel %vm300, %v793, 0.0
      %846 = vadd.xlane.f32.xlu0 %v845
      %v847 = vpop.xlane.xlu0 %846
      %v848 = vsel %vm300, %v794, 0.0
      %849 = vadd.xlane.f32.xlu0 %v848
      %v850 = vpop.xlane.xlu0 %849
      %v851 = vsel %vm300, %v795, 0.0
      %852 = vadd.xlane.f32.xlu0 %v851
      %v853 = vpop.xlane.xlu0 %852
      %v854 = vsel %vm300, %v796, 0.0
      %855 = vadd.xlane.f32.xlu0 %v854
      %v856 = vpop.xlane.xlu0 %855
      %v857 = vsel %vm300, %v797, 0.0
      %858 = vadd.xlane.f32.xlu0 %v857
      %v859 = vpop.xlane.xlu0 %858
      %v860 = vsel %vm300, %v798, 0.0
      %861 = vadd.xlane.f32.xlu0 %v860
      %v862 = vpop.xlane.xlu0 %861
      %v863 = vsel %vm300, %v799, 0.0
      %864 = vadd.xlane.f32.xlu0 %v863
      %v865 = vpop.xlane.xlu0 %864
      %v866 = vsel %vm300, %v800, 0.0
      %867 = vadd.xlane.f32.xlu0 %v866
      %v868 = vpop.xlane.xlu0 %867
      %v869 = vsel %vm300, %v801, 0.0
      %870 = vadd.xlane.f32.xlu0 %v869
      %v871 = vpop.xlane.xlu0 %870
      %v872 = vsel %vm300, %v802, 0.0
      %873 = vadd.xlane.f32.xlu0 %v872
      %v874 = vpop.xlane.xlu0 %873
      %v875 = vsel %vm300, %v803, 0.0
      %876 = vadd.xlane.f32.xlu0 %v875
      %v877 = vpop.xlane.xlu0 %876
      %v878 = vsel %vm300, %v804, 0.0
      %879 = vadd.xlane.f32.xlu0 %v878
      %v880 = vpop.xlane.xlu0 %879
      %v881 = vsel %vm300, %v805, 0.0
      %882 = vadd.xlane.f32.xlu0 %v881
      %v883 = vpop.xlane.xlu0 %882
      %v884 = vsel %vm300, %v806, 0.0
      %885 = vadd.xlane.f32.xlu0 %v884
      %v886 = vpop.xlane.xlu0 %885
      %v887 = vsel %vm300, %v807, 0.0
      %888 = vadd.xlane.f32.xlu0 %v887
      %v889 = vpop.xlane.xlu0 %888
      %v890 = vsel %vm300, %v808, 0.0
      %891 = vadd.xlane.f32.xlu0 %v890
      %v892 = vpop.xlane.xlu0 %891
      %v893 = vsel %vm300, %v809, 0.0
      %894 = vadd.xlane.f32.xlu0 %v893
      %v895 = vpop.xlane.xlu0 %894
      %v896 = vsel %vm300, %v810, 0.0
      %897 = vadd.xlane.f32.xlu0 %v896
      %v898 = vpop.xlane.xlu0 %897
      %v899 = vsel %vm300, %v811, 0.0
      %900 = vadd.xlane.f32.xlu0 %v899
      %v901 = vpop.xlane.xlu0 %900
      %v902 = vsel %vm300, %v812, 0.0
      %903 = vadd.xlane.f32.xlu0 %v902
      %v904 = vpop.xlane.xlu0 %903
      %v905 = vsel %vm300, %v813, 0.0
      %906 = vadd.xlane.f32.xlu0 %v905
      %v907 = vpop.xlane.xlu0 %906
      %v908 = vsel %vm300, %v814, 0.0
      %909 = vadd.xlane.f32.xlu0 %v908
      %v910 = vpop.xlane.xlu0 %909
      %v911 = vsub.f32 %v817, %v303
      %v912 = vsub.f32 %v820, %v306
      %v913 = vsub.f32 %v823, %v309
      %v914 = vsub.f32 %v826, %v312
      %v915 = vsub.f32 %v829, %v315
      %v916 = vsub.f32 %v832, %v318
      %v917 = vsub.f32 %v835, %v321
      %v918 = vsub.f32 %v838, %v324
      %v919 = vsub.f32 %v841, %v327
      %v920 = vsub.f32 %v844, %v330
      %v921 = vsub.f32 %v847, %v333
      %v922 = vsub.f32 %v850, %v336
      %v923 = vsub.f32 %v853, %v339
      %v924 = vsub.f32 %v856, %v342
      %v925 = vsub.f32 %v859, %v345
      %v926 = vsub.f32 %v862, %v348
      %v927 = vsub.f32 %v865, %v351
      %v928 = vsub.f32 %v868, %v354
      %v929 = vsub.f32 %v871, %v357
      %v930 = vsub.f32 %v874, %v360
      %v931 = vsub.f32 %v877, %v363
      %v932 = vsub.f32 %v880, %v366
      %v933 = vsub.f32 %v883, %v369
      %v934 = vsub.f32 %v886, %v372
      %v935 = vsub.f32 %v889, %v375
      %v936 = vsub.f32 %v892, %v378
      %v937 = vsub.f32 %v895, %v381
      %v938 = vsub.f32 %v898, %v384
      %v939 = vsub.f32 %v901, %v387
      %v940 = vsub.f32 %v904, %v390
      %v941 = vsub.f32 %v907, %v393
      %v942 = vsub.f32 %v910, %v396
      %v943 = vsub.f32 %v911, %v590
      %v944 = vsub.f32 %v912, %v592
      %v945 = vsub.f32 %v913, %v594
      %v946 = vsub.f32 %v914, %v596
      %v947 = vsub.f32 %v915, %v598
      %v948 = vsub.f32 %v916, %v600
      %v949 = vsub.f32 %v917, %v602
      %v950 = vsub.f32 %v918, %v604
      %v951 = vsub.f32 %v919, %v606
      %v952 = vsub.f32 %v920, %v608
      %v953 = vsub.f32 %v921, %v610
      %v954 = vsub.f32 %v922, %v612
      %v955 = vsub.f32 %v923, %v614
      %v956 = vsub.f32 %v924, %v616
      %v957 = vsub.f32 %v925, %v618
      %v958 = vsub.f32 %v926, %v620
      %v959 = vsub.f32 %v927, %v622
      %v960 = vsub.f32 %v928, %v624
      %v961 = vsub.f32 %v929, %v626
      %v962 = vsub.f32 %v930, %v628
      %v963 = vsub.f32 %v931, %v630
      %v964 = vsub.f32 %v932, %v632
      %v965 = vsub.f32 %v933, %v634
      %v966 = vsub.f32 %v934, %v636
      %v967 = vsub.f32 %v935, %v638
      %v968 = vsub.f32 %v936, %v640
      %v969 = vsub.f32 %v937, %v642
      %v970 = vsub.f32 %v938, %v644
      %v971 = vsub.f32 %v939, %v646
      %v972 = vsub.f32 %v940, %v648
      %v973 = vsub.f32 %v941, %v650
      %v974 = vsub.f32 %v942, %v652
      %v975 = vsub.f32 0.0, %v204
      %v976 = vsub.f32 0.0, %v205
      %v977 = vsub.f32 0.0, %v206
      %v978 = vsub.f32 0.0, %v207
      %v979 = vsub.f32 0.0, %v208
      %v980 = vsub.f32 0.0, %v209
      %v981 = vsub.f32 0.0, %v210
      %v982 = vsub.f32 0.0, %v211
      %v983 = vsub.f32 0.0, %v212
      %v984 = vsub.f32 0.0, %v213
      %v985 = vsub.f32 0.0, %v214
      %v986 = vsub.f32 0.0, %v215
      %v987 = vsub.f32 0.0, %v216
      %v988 = vsub.f32 0.0, %v217
      %v989 = vsub.f32 0.0, %v218
      %v990 = vsub.f32 0.0, %v219
      %v991 = vsub.f32 0.0, %v220
      %v992 = vsub.f32 0.0, %v221
      %v993 = vsub.f32 0.0, %v222
      %v994 = vsub.f32 0.0, %v223
      %v995 = vsub.f32 0.0, %v224
      %v996 = vsub.f32 0.0, %v225
      %v997 = vsub.f32 0.0, %v226
      %v998 = vsub.f32 0.0, %v227
      %v999 = vsub.f32 0.0, %v228
      %v1000 = vsub.f32 0.0, %v229
      %v1001 = vsub.f32 0.0, %v230
      %v1002 = vsub.f32 0.0, %v231
      %v1003 = vsub.f32 0.0, %v232
      %v1004 = vsub.f32 0.0, %v233
      %v1005 = vsub.f32 0.0, %v234
      %v1006 = vsub.f32 0.0, %v235
      %v1007 = vmul.f32 %v975, %v943
      %v1008 = vmul.f32 %v976, %v944
      %v1009 = vmul.f32 %v977, %v945
      %v1010 = vmul.f32 %v978, %v946
      %v1011 = vmul.f32 %v979, %v947
      %v1012 = vmul.f32 %v980, %v948
      %v1013 = vmul.f32 %v981, %v949
      %v1014 = vmul.f32 %v982, %v950
      %v1015 = vmul.f32 %v983, %v951
      %v1016 = vmul.f32 %v984, %v952
      %v1017 = vmul.f32 %v985, %v953
      %v1018 = vmul.f32 %v986, %v954
      %v1019 = vmul.f32 %v987, %v955
      %v1020 = vmul.f32 %v988, %v956
      %v1021 = vmul.f32 %v989, %v957
      %v1022 = vmul.f32 %v990, %v958
      %v1023 = vmul.f32 %v991, %v959
      %v1024 = vmul.f32 %v992, %v960
      %v1025 = vmul.f32 %v993, %v961
      %v1026 = vmul.f32 %v994, %v962
      %v1027 = vmul.f32 %v995, %v963
      %v1028 = vmul.f32 %v996, %v964
      %v1029 = vmul.f32 %v997, %v965
      %v1030 = vmul.f32 %v998, %v966
      %v1031 = vmul.f32 %v999, %v967
      %v1032 = vmul.f32 %v1000, %v968
      %v1033 = vmul.f32 %v1001, %v969
      %v1034 = vmul.f32 %v1002, %v970
      %v1035 = vmul.f32 %v1003, %v971
      %v1036 = vmul.f32 %v1004, %v972
      %v1037 = vmul.f32 %v1005, %v973
      %v1038 = vmul.f32 %v1006, %v974
      %v1039 = vsub.f32 0.0, %v1007
      %v1040 = vsub.f32 0.0, %v1008
      %v1041 = vsub.f32 0.0, %v1009
      %v1042 = vsub.f32 0.0, %v1010
      %v1043 = vsub.f32 0.0, %v1011
      %v1044 = vsub.f32 0.0, %v1012
      %v1045 = vsub.f32 0.0, %v1013
      %v1046 = vsub.f32 0.0, %v1014
      %v1047 = vsub.f32 0.0, %v1015
      %v1048 = vsub.f32 0.0, %v1016
      %v1049 = vsub.f32 0.0, %v1017
      %v1050 = vsub.f32 0.0, %v1018
      %v1051 = vsub.f32 0.0, %v1019
      %v1052 = vsub.f32 0.0, %v1020
      %v1053 = vsub.f32 0.0, %v1021
      %v1054 = vsub.f32 0.0, %v1022
      %v1055 = vsub.f32 0.0, %v1023
      %v1056 = vsub.f32 0.0, %v1024
      %v1057 = vsub.f32 0.0, %v1025
      %v1058 = vsub.f32 0.0, %v1026
      %v1059 = vsub.f32 0.0, %v1027
      %v1060 = vsub.f32 0.0, %v1028
      %v1061 = vsub.f32 0.0, %v1029
      %v1062 = vsub.f32 0.0, %v1030
      %v1063 = vsub.f32 0.0, %v1031
      %v1064 = vsub.f32 0.0, %v1032
      %v1065 = vsub.f32 0.0, %v1033
      %v1066 = vsub.f32 0.0, %v1034
      %v1067 = vsub.f32 0.0, %v1035
      %v1068 = vsub.f32 0.0, %v1036
      %v1069 = vsub.f32 0.0, %v1037
      %v1070 = vsub.f32 0.0, %v1038
      %v1071 = vmul.f32 %v1039, 1.442695
      %v1072 = vpow.pop %v1071
      %v1073 = vmul.f32 %v1040, 1.442695
      %v1074 = vpow.pop %v1073
      %v1075 = vmul.f32 %v1041, 1.442695
      %v1076 = vpow.pop %v1075
      %v1077 = vmul.f32 %v1042, 1.442695
      %v1078 = vpow.pop %v1077
      %v1079 = vmul.f32 %v1043, 1.442695
      %v1080 = vpow.pop %v1079
      %v1081 = vmul.f32 %v1044, 1.442695
      %v1082 = vpow.pop %v1081
      %v1083 = vmul.f32 %v1045, 1.442695
      %v1084 = vpow.pop %v1083
      %v1085 = vmul.f32 %v1046, 1.442695
      %v1086 = vpow.pop %v1085
      %v1087 = vmul.f32 %v1047, 1.442695
      %v1088 = vpow.pop %v1087
      %v1089 = vmul.f32 %v1048, 1.442695
      %v1090 = vpow.pop %v1089
      %v1091 = vmul.f32 %v1049, 1.442695
      %v1092 = vpow.pop %v1091
      %v1093 = vmul.f32 %v1050, 1.442695
      %v1094 = vpow.pop %v1093
      %v1095 = vmul.f32 %v1051, 1.442695
      %v1096 = vpow.pop %v1095
      %v1097 = vmul.f32 %v1052, 1.442695
      %v1098 = vpow.pop %v1097
      %v1099 = vmul.f32 %v1053, 1.442695
      %v1100 = vpow.pop %v1099
      %v1101 = vmul.f32 %v1054, 1.442695
      %v1102 = vpow.pop %v1101
      %v1103 = vmul.f32 %v1055, 1.442695
      %v1104 = vpow.pop %v1103
      %v1105 = vmul.f32 %v1056, 1.442695
      %v1106 = vpow.pop %v1105
      %v1107 = vmul.f32 %v1057, 1.442695
      %v1108 = vpow.pop %v1107
      %v1109 = vmul.f32 %v1058, 1.442695
      %v1110 = vpow.pop %v1109
      %v1111 = vmul.f32 %v1059, 1.442695
      %v1112 = vpow.pop %v1111
      %v1113 = vmul.f32 %v1060, 1.442695
      %v1114 = vpow.pop %v1113
      %v1115 = vmul.f32 %v1061, 1.442695
      %v1116 = vpow.pop %v1115
      %v1117 = vmul.f32 %v1062, 1.442695
      %v1118 = vpow.pop %v1117
      %v1119 = vmul.f32 %v1063, 1.442695
      %v1120 = vpow.pop %v1119
      %v1121 = vmul.f32 %v1064, 1.442695
      %v1122 = vpow.pop %v1121
      %v1123 = vmul.f32 %v1065, 1.442695
      %v1124 = vpow.pop %v1123
      %v1125 = vmul.f32 %v1066, 1.442695
      %v1126 = vpow.pop %v1125
      %v1127 = vmul.f32 %v1067, 1.442695
      %v1128 = vpow.pop %v1127
      %v1129 = vmul.f32 %v1068, 1.442695
      %v1130 = vpow.pop %v1129
      %v1131 = vmul.f32 %v1069, 1.442695
      %v1132 = vpow.pop %v1131
      %v1133 = vmul.f32 %v1070, 1.442695
      %v1134 = vpow.pop %v1133
      %v1135 = vsub.f32 1.0, %v1072
      %v1136 = vsub.f32 1.0, %v1074
      %v1137 = vsub.f32 1.0, %v1076
      %v1138 = vsub.f32 1.0, %v1078
      %v1139 = vsub.f32 1.0, %v1080
      %v1140 = vsub.f32 1.0, %v1082
      %v1141 = vsub.f32 1.0, %v1084
      %v1142 = vsub.f32 1.0, %v1086
      %v1143 = vsub.f32 1.0, %v1088
      %v1144 = vsub.f32 1.0, %v1090
      %v1145 = vsub.f32 1.0, %v1092
      %v1146 = vsub.f32 1.0, %v1094
      %v1147 = vsub.f32 1.0, %v1096
      %v1148 = vsub.f32 1.0, %v1098
      %v1149 = vsub.f32 1.0, %v1100
      %v1150 = vsub.f32 1.0, %v1102
      %v1151 = vsub.f32 1.0, %v1104
      %v1152 = vsub.f32 1.0, %v1106
      %v1153 = vsub.f32 1.0, %v1108
      %v1154 = vsub.f32 1.0, %v1110
      %v1155 = vsub.f32 1.0, %v1112
      %v1156 = vsub.f32 1.0, %v1114
      %v1157 = vsub.f32 1.0, %v1116
      %v1158 = vsub.f32 1.0, %v1118
      %v1159 = vsub.f32 1.0, %v1120
      %v1160 = vsub.f32 1.0, %v1122
      %v1161 = vsub.f32 1.0, %v1124
      %v1162 = vsub.f32 1.0, %v1126
      %v1163 = vsub.f32 1.0, %v1128
      %v1164 = vsub.f32 1.0, %v1130
      %v1165 = vsub.f32 1.0, %v1132
      %v1166 = vsub.f32 1.0, %v1134
      %v1167 = vmul.f32 %v1135, %v1135
      %v1168 = vmul.f32 %v1136, %v1136
      %v1169 = vmul.f32 %v1137, %v1137
      %v1170 = vmul.f32 %v1138, %v1138
      %v1171 = vmul.f32 %v1139, %v1139
      %v1172 = vmul.f32 %v1140, %v1140
      %v1173 = vmul.f32 %v1141, %v1141
      %v1174 = vmul.f32 %v1142, %v1142
      %v1175 = vmul.f32 %v1143, %v1143
      %v1176 = vmul.f32 %v1144, %v1144
      %v1177 = vmul.f32 %v1145, %v1145
      %v1178 = vmul.f32 %v1146, %v1146
      %v1179 = vmul.f32 %v1147, %v1147
      %v1180 = vmul.f32 %v1148, %v1148
      %v1181 = vmul.f32 %v1149, %v1149
      %v1182 = vmul.f32 %v1150, %v1150
      %v1183 = vmul.f32 %v1151, %v1151
      %v1184 = vmul.f32 %v1152, %v1152
      %v1185 = vmul.f32 %v1153, %v1153
      %v1186 = vmul.f32 %v1154, %v1154
      %v1187 = vmul.f32 %v1155, %v1155
      %v1188 = vmul.f32 %v1156, %v1156
      %v1189 = vmul.f32 %v1157, %v1157
      %v1190 = vmul.f32 %v1158, %v1158
      %v1191 = vmul.f32 %v1159, %v1159
      %v1192 = vmul.f32 %v1160, %v1160
      %v1193 = vmul.f32 %v1161, %v1161
      %v1194 = vmul.f32 %v1162, %v1162
      %v1195 = vmul.f32 %v1163, %v1163
      %v1196 = vmul.f32 %v1164, %v1164
      %v1197 = vmul.f32 %v1165, %v1165
      %v1198 = vmul.f32 %v1166, %v1166
      %v1199 = vmul.f32 %v1167, %v1007
      %v1200 = vmul.f32 %v1168, %v1008
      %v1201 = vmul.f32 %v1169, %v1009
      %v1202 = vmul.f32 %v1170, %v1010
      %v1203 = vmul.f32 %v1171, %v1011
      %v1204 = vmul.f32 %v1172, %v1012
      %v1205 = vmul.f32 %v1173, %v1013
      %v1206 = vmul.f32 %v1174, %v1014
      %v1207 = vmul.f32 %v1175, %v1015
      %v1208 = vmul.f32 %v1176, %v1016
      %v1209 = vmul.f32 %v1177, %v1017
      %v1210 = vmul.f32 %v1178, %v1018
      %v1211 = vmul.f32 %v1179, %v1019
      %v1212 = vmul.f32 %v1180, %v1020
      %v1213 = vmul.f32 %v1181, %v1021
      %v1214 = vmul.f32 %v1182, %v1022
      %v1215 = vmul.f32 %v1183, %v1023
      %v1216 = vmul.f32 %v1184, %v1024
      %v1217 = vmul.f32 %v1185, %v1025
      %v1218 = vmul.f32 %v1186, %v1026
      %v1219 = vmul.f32 %v1187, %v1027
      %v1220 = vmul.f32 %v1188, %v1028
      %v1221 = vmul.f32 %v1189, %v1029
      %v1222 = vmul.f32 %v1190, %v1030
      %v1223 = vmul.f32 %v1191, %v1031
      %v1224 = vmul.f32 %v1192, %v1032
      %v1225 = vmul.f32 %v1193, %v1033
      %v1226 = vmul.f32 %v1194, %v1034
      %v1227 = vmul.f32 %v1195, %v1035
      %v1228 = vmul.f32 %v1196, %v1036
      %v1229 = vmul.f32 %v1197, %v1037
      %v1230 = vmul.f32 %v1198, %v1038
      %s1231 = smul.u32 %s13, 256
      %v1232 = vlaneseq
      %v1233 = vshrl.u32 %v1232, 7
      %v1234 = vadd.s32 %v1233, 8
      %v1235 = vadd.s32 %v1233, 16
      %v1236 = vadd.s32 %v1233, 24
      %v1237 = vadd.s32 %v1233, 32
      %v1238 = vadd.s32 %v1233, 40
      %v1239 = vadd.s32 %v1233, 48
      %v1240 = vadd.s32 %v1233, 56
      %v1241 = vadd.s32 %v1233, 64
      %v1242 = vadd.s32 %v1233, 72
      %v1243 = vadd.s32 %v1233, 80
      %v1244 = vadd.s32 %v1233, 88
      %v1245 = vadd.s32 %v1233, 96
      %v1246 = vadd.s32 %v1233, 104
      %v1247 = vadd.s32 %v1233, 112
      %v1248 = vadd.s32 %v1233, 120
      %v1249 = vadd.s32 %v1233, 128
      %v1250 = vadd.s32 %v1233, 136
      %v1251 = vadd.s32 %v1233, 144
      %v1252 = vadd.s32 %v1233, 152
      %v1253 = vadd.s32 %v1233, 160
      %v1254 = vadd.s32 %v1233, 168
      %v1255 = vadd.s32 %v1233, 176
      %v1256 = vadd.s32 %v1233, 184
      %v1257 = vadd.s32 %v1233, 192
      %v1258 = vadd.s32 %v1233, 200
      %v1259 = vadd.s32 %v1233, 208
      %v1260 = vadd.s32 %v1233, 216
      %v1261 = vadd.s32 %v1233, 224
      %v1262 = vadd.s32 %v1233, 232
      %v1263 = vadd.s32 %v1233, 240
      %v1264 = vadd.s32 %v1233, 248
      %v1265 = vstv %s1231
      %v1266 = vadd.s32 %v1265, %v1233
      %v1267 = vadd.s32 %v1265, %v1234
      %v1268 = vadd.s32 %v1265, %v1235
      %v1269 = vadd.s32 %v1265, %v1236
      %v1270 = vadd.s32 %v1265, %v1237
      %v1271 = vadd.s32 %v1265, %v1238
      %v1272 = vadd.s32 %v1265, %v1239
      %v1273 = vadd.s32 %v1265, %v1240
      %v1274 = vadd.s32 %v1265, %v1241
      %v1275 = vadd.s32 %v1265, %v1242
      %v1276 = vadd.s32 %v1265, %v1243
      %v1277 = vadd.s32 %v1265, %v1244
      %v1278 = vadd.s32 %v1265, %v1245
      %v1279 = vadd.s32 %v1265, %v1246
      %v1280 = vadd.s32 %v1265, %v1247
      %v1281 = vadd.s32 %v1265, %v1248
      %v1282 = vadd.s32 %v1265, %v1249
      %v1283 = vadd.s32 %v1265, %v1250
      %v1284 = vadd.s32 %v1265, %v1251
      %v1285 = vadd.s32 %v1265, %v1252
      %v1286 = vadd.s32 %v1265, %v1253
      %v1287 = vadd.s32 %v1265, %v1254
      %v1288 = vadd.s32 %v1265, %v1255
      %v1289 = vadd.s32 %v1265, %v1256
      %v1290 = vadd.s32 %v1265, %v1257
      %v1291 = vadd.s32 %v1265, %v1258
      %v1292 = vadd.s32 %v1265, %v1259
      %v1293 = vadd.s32 %v1265, %v1260
      %v1294 = vadd.s32 %v1265, %v1261
      %v1295 = vadd.s32 %v1265, %v1262
      %v1296 = vadd.s32 %v1265, %v1263
      %v1297 = vadd.s32 %v1265, %v1264
      %vm1298 = vcmp.lt.s32.totalorder %v1266, 600
      %vm1299 = vcmp.lt.s32.totalorder %v1267, 600
      %vm1300 = vcmp.lt.s32.totalorder %v1268, 600
      %vm1301 = vcmp.lt.s32.totalorder %v1269, 600
      %vm1302 = vcmp.lt.s32.totalorder %v1270, 600
      %vm1303 = vcmp.lt.s32.totalorder %v1271, 600
      %vm1304 = vcmp.lt.s32.totalorder %v1272, 600
      %vm1305 = vcmp.lt.s32.totalorder %v1273, 600
      %vm1306 = vcmp.lt.s32.totalorder %v1274, 600
      %vm1307 = vcmp.lt.s32.totalorder %v1275, 600
      %vm1308 = vcmp.lt.s32.totalorder %v1276, 600
      %vm1309 = vcmp.lt.s32.totalorder %v1277, 600
      %vm1310 = vcmp.lt.s32.totalorder %v1278, 600
      %vm1311 = vcmp.lt.s32.totalorder %v1279, 600
      %vm1312 = vcmp.lt.s32.totalorder %v1280, 600
      %vm1313 = vcmp.lt.s32.totalorder %v1281, 600
      %vm1314 = vcmp.lt.s32.totalorder %v1282, 600
      %vm1315 = vcmp.lt.s32.totalorder %v1283, 600
      %vm1316 = vcmp.lt.s32.totalorder %v1284, 600
      %vm1317 = vcmp.lt.s32.totalorder %v1285, 600
      %vm1318 = vcmp.lt.s32.totalorder %v1286, 600
      %vm1319 = vcmp.lt.s32.totalorder %v1287, 600
      %vm1320 = vcmp.lt.s32.totalorder %v1288, 600
      %vm1321 = vcmp.lt.s32.totalorder %v1289, 600
      %vm1322 = vcmp.lt.s32.totalorder %v1290, 600
      %vm1323 = vcmp.lt.s32.totalorder %v1291, 600
      %vm1324 = vcmp.lt.s32.totalorder %v1292, 600
      %vm1325 = vcmp.lt.s32.totalorder %v1293, 600
      %vm1326 = vcmp.lt.s32.totalorder %v1294, 600
      %vm1327 = vcmp.lt.s32.totalorder %v1295, 600
      %vm1328 = vcmp.lt.s32.totalorder %v1296, 600
      %vm1329 = vcmp.lt.s32.totalorder %v1297, 600
      %v1330 = vsel %vm1298, %v1199, 0.0
      %v1331 = vsel %vm1299, %v1200, 0.0
      %v1332 = vsel %vm1300, %v1201, 0.0
      %v1333 = vsel %vm1301, %v1202, 0.0
      %v1334 = vsel %vm1302, %v1203, 0.0
      %v1335 = vsel %vm1303, %v1204, 0.0
      %v1336 = vsel %vm1304, %v1205, 0.0
      %v1337 = vsel %vm1305, %v1206, 0.0
      %v1338 = vsel %vm1306, %v1207, 0.0
      %v1339 = vsel %vm1307, %v1208, 0.0
      %v1340 = vsel %vm1308, %v1209, 0.0
      %v1341 = vsel %vm1309, %v1210, 0.0
      %v1342 = vsel %vm1310, %v1211, 0.0
      %v1343 = vsel %vm1311, %v1212, 0.0
      %v1344 = vsel %vm1312, %v1213, 0.0
      %v1345 = vsel %vm1313, %v1214, 0.0
      %v1346 = vsel %vm1314, %v1215, 0.0
      %v1347 = vsel %vm1315, %v1216, 0.0
      %v1348 = vsel %vm1316, %v1217, 0.0
      %v1349 = vsel %vm1317, %v1218, 0.0
      %v1350 = vsel %vm1318, %v1219, 0.0
      %v1351 = vsel %vm1319, %v1220, 0.0
      %v1352 = vsel %vm1320, %v1221, 0.0
      %v1353 = vsel %vm1321, %v1222, 0.0
      %v1354 = vsel %vm1322, %v1223, 0.0
      %v1355 = vsel %vm1323, %v1224, 0.0
      %v1356 = vsel %vm1324, %v1225, 0.0
      %v1357 = vsel %vm1325, %v1226, 0.0
      %v1358 = vsel %vm1326, %v1227, 0.0
      %v1359 = vsel %vm1327, %v1228, 0.0
      %v1360 = vsel %vm1328, %v1229, 0.0
      %v1361 = vsel %vm1329, %v1230, 0.0
      %vm1362 = vcmask 7168
      %v1363 = vsel %vm1362, %v1330, 0.0
      %v1364 = vsel %vm1362, %v1331, 0.0
      %v1365 = vadd.f32 %v1363, %v1364
      %v1366 = vsel %vm1362, %v1332, 0.0
      %v1367 = vadd.f32 %v1365, %v1366
      %v1368 = vsel %vm1362, %v1333, 0.0
      %v1369 = vadd.f32 %v1367, %v1368
      %v1370 = vsel %vm1362, %v1334, 0.0
      %v1371 = vadd.f32 %v1369, %v1370
      %v1372 = vsel %vm1362, %v1335, 0.0
      %v1373 = vadd.f32 %v1371, %v1372
      %v1374 = vsel %vm1362, %v1336, 0.0
      %v1375 = vadd.f32 %v1373, %v1374
      %v1376 = vsel %vm1362, %v1337, 0.0
      %v1377 = vadd.f32 %v1375, %v1376
      %v1378 = vsel %vm1362, %v1338, 0.0
      %v1379 = vadd.f32 %v1377, %v1378
      %v1380 = vsel %vm1362, %v1339, 0.0
      %v1381 = vadd.f32 %v1379, %v1380
      %v1382 = vsel %vm1362, %v1340, 0.0
      %v1383 = vadd.f32 %v1381, %v1382
      %v1384 = vsel %vm1362, %v1341, 0.0
      %v1385 = vadd.f32 %v1383, %v1384
      %v1386 = vsel %vm1362, %v1342, 0.0
      %v1387 = vadd.f32 %v1385, %v1386
      %v1388 = vsel %vm1362, %v1343, 0.0
      %v1389 = vadd.f32 %v1387, %v1388
      %v1390 = vsel %vm1362, %v1344, 0.0
      %v1391 = vadd.f32 %v1389, %v1390
      %v1392 = vsel %vm1362, %v1345, 0.0
      %v1393 = vadd.f32 %v1391, %v1392
      %v1394 = vsel %vm1362, %v1346, 0.0
      %v1395 = vadd.f32 %v1393, %v1394
      %v1396 = vsel %vm1362, %v1347, 0.0
      %v1397 = vadd.f32 %v1395, %v1396
      %v1398 = vsel %vm1362, %v1348, 0.0
      %v1399 = vadd.f32 %v1397, %v1398
      %v1400 = vsel %vm1362, %v1349, 0.0
      %v1401 = vadd.f32 %v1399, %v1400
      %v1402 = vsel %vm1362, %v1350, 0.0
      %v1403 = vadd.f32 %v1401, %v1402
      %v1404 = vsel %vm1362, %v1351, 0.0
      %v1405 = vadd.f32 %v1403, %v1404
      %v1406 = vsel %vm1362, %v1352, 0.0
      %v1407 = vadd.f32 %v1405, %v1406
      %v1408 = vsel %vm1362, %v1353, 0.0
      %v1409 = vadd.f32 %v1407, %v1408
      %v1410 = vsel %vm1362, %v1354, 0.0
      %v1411 = vadd.f32 %v1409, %v1410
      %v1412 = vsel %vm1362, %v1355, 0.0
      %v1413 = vadd.f32 %v1411, %v1412
      %v1414 = vsel %vm1362, %v1356, 0.0
      %v1415 = vadd.f32 %v1413, %v1414
      %v1416 = vsel %vm1362, %v1357, 0.0
      %v1417 = vadd.f32 %v1415, %v1416
      %v1418 = vsel %vm1362, %v1358, 0.0
      %v1419 = vadd.f32 %v1417, %v1418
      %v1420 = vsel %vm1362, %v1359, 0.0
      %v1421 = vadd.f32 %v1419, %v1420
      %v1422 = vsel %vm1362, %v1360, 0.0
      %v1423 = vadd.f32 %v1421, %v1422
      %v1424 = vsel %vm1362, %v1361, 0.0
      %v1425 = vadd.f32 %v1423, %v1424
      %v1426 = vrot.slane %v1425, 4
      %v1427 = vadd.f32 %v1425, %v1426
      %v1428 = vrot.slane %v1427, 2
      %v1429 = vadd.f32 %v1427, %v1428
      %v1430 = vrot.slane %v1429, 1
      %v1431 = vadd.f32 %v1429, %v1430
      %vm1432 = vcmask 0
      %1433 = vst.msk [vmem:[%s203] sm:$0x1] %vm1432, %v1431
      %p1434 = scmp.lt.s32.totalorder %s13, 2
      %s1435 = scalar_select %p1434, %s13, 2
      %s1436 = scalar_lea.vmem %s2, %s1435
      // Predicated region
      $region29: #{tpu_custom_call.1} parent=27 // pred_check
        %p1437 = pneg %p83
      $region30: #{tpu_custom_call.1} parent=27 // pred_check_branch
        %1439 = sbr.rel (%p1437) target = $region32
      $region31: #{tpu_custom_call.1} parent=27 // pred_region
        _
      $region32: #{tpu_custom_call.1} parent=27 // pred_fallthru
        _
    $region28: #{tpu_custom_call.1} parent=5 // pred_fallthru
      _
    %p1440 = scmp.le.s32.totalorder 2, %s8
    // Predicated region
    $region33: #{tpu_custom_call.1} parent=5 // pred_check
      %p1441 = pneg %p1440
    $region34: #{tpu_custom_call.1} parent=5 // pred_check_branch
      %1443 = sbr.rel (%p1441) target = $region36
    $region35: #{tpu_custom_call.1} parent=5 // pred_region
      %s1444 = ssub.s32 %s8, 2
      // Predicated region
      $region37: #{tpu_custom_call.1} parent=35 // pred_check
        %p1445 = pneg %p89
      $region38: #{tpu_custom_call.1} parent=35 // pred_check_branch
        %1447 = sbr.rel (%p1445) target = $region40
      $region39: #{tpu_custom_call.1} parent=35 // pred_region
        %p1448 = scmp.lt.s32.totalorder %s14, 2
        %s1449 = scalar_select %p1448, %s14, 2
        %s1450 = scalar_lea.vmem %s2, %s1449
      $region40: #{tpu_custom_call.1} parent=35 // pred_fallthru
        _
    $region36: #{tpu_custom_call.1} parent=5 // pred_fallthru
      _
  $region6: #{tpu_custom_call.1} parent=0 // loop_footer
    %s12 = sadd.s32 1, %s8
  $region7: #{tpu_custom_call.1} parent=0 // loop_footer_branch
    %7 = sbr.rel target = $region3
  $region8: #{tpu_custom_call.1} parent=0 // loop_exit
    _

</llo_original>
